<compile_context>
chip_gen: v7x
topology: tpu7x:2x2x1
jax: 0.10.0
libtpu: 0.0.40
codegen_flags: <defaults>
</compile_context>

<pallas_src>
import functools

import jax
import jax.numpy as jnp
from jax import lax
from jax.experimental import pallas as pl
from jax.experimental.pallas import tpu as pltpu

PAD = 128  # lane-padded feature width used for every feature axis inside the kernel


# ----------------------------- Pallas kernel --------------------------------


def _fused_gine_kernel(
    # inputs (order == in_specs)
    x0_hbm,      # (Np, PAD)  f32   initial node features, memory_space=ANY (HBM)
    asrc_ref,    # (TE, Np)   bf16  one-hot(src) edge tile
    adstT_ref,   # (Np, TE)   bf16  one-hot(dst) edge tile, pre-transposed
    eattr_ref,   # (TE, PAD)  f32   edge features tile (zero padded)
    we_ref,      # (PAD, PAD) f32   GINE edge-linear weight, layer l
    w1_ref,      # (PAD, PAD) f32   MLP linear-1 weight, layer l
    w2_ref,      # (PAD, PAD) f32   MLP linear-2 weight, layer l
    vec_ref,     # (8, PAD)   f32   per-layer vectors: [be, b1, gamma, beta, b2, 0,0,0]
    pool_ref,    # (Gp, Np)   bf16  graph-membership one-hot
    cw1_ref,     # (PAD, PAD) f32   classifier linear-1
    cb1_ref,     # (1, PAD)
    cw2_ref,     # (PAD, PAD) f32   classifier linear-2
    cb2_ref,     # (1, PAD)
    # output
    out_ref,     # (Gp, PAD)  f32
    # scratch
    x_cur,       # (Np, PAD)  f32   current node features (carried across layers)
    x_cur_bf,    # (Np, PAD)  bf16  bf16 copy of x_cur (hoisted cast, per layer)
    aggr,        # (Np, PAD)  f32   scatter-add accumulator (carried across edge tiles)
    x0_sem,      # DMA semaphore for the one-time x0 copy
    *,
    eps,
    bn_eps,
    n_nodes,
    num_layers,
):
    l = pl.program_id(0)
    et = pl.program_id(1)
    n_et = pl.num_programs(1)

    @pl.when(jnp.logical_and(l == 0, et == 0))
    def _load_x0():
        cp = pltpu.make_async_copy(x0_hbm, x_cur, x0_sem)
        cp.start()
        cp.wait()
        x_cur_bf[...] = x_cur[...].astype(jnp.bfloat16)

    @pl.when(et == 0)
    def _init_aggr():
        aggr[...] = jnp.zeros_like(aggr)

    # ---- per-edge-tile message + partial scatter-add (bf16 MXU, f32 accum) ----
    vecs = vec_ref[...]
    be = vecs[0:1, :]
    # gather source node features: (TE, PAD); bf16 cast of x is pre-hoisted
    x_j = jnp.dot(asrc_ref[...], x_cur_bf[...], preferred_element_type=jnp.float32)
    # edge-feature projection: (TE, PAD)
    e = jnp.dot(eattr_ref[...], we_ref[...],
                preferred_element_type=jnp.float32) + be
    # GINE message
    m = jnp.maximum(x_j + e, 0.0).astype(jnp.bfloat16)
    # scatter-add by destination: pre-transposed incidence -> plain matmul
    aggr[...] += jnp.dot(adstT_ref[...], m, preferred_element_type=jnp.float32)

    # ---- at the last edge tile: finish the layer (update MLP + BN + act) ----
    @pl.when(et == n_et - 1)
    def _finish_layer():
        b1 = vecs[1:2, :]
        gamma = vecs[2:3, :]
        beta = vecs[3:4, :]
        b2 = vecs[4:5, :]

        np_rows = x_cur.shape[0]
        # valid-row indicator as a (1, Np) row vector; BN sums go through the MXU
        mask_row = (lax.broadcasted_iota(jnp.int32, (1, np_rows), 1)
                    < n_nodes).astype(jnp.float32)

        # h = (1+eps)*x + aggr, written in place into the aggr scratch
        aggr[...] = (1.0 + eps) * x_cur[...] + aggr[...]
        h1 = jnp.dot(aggr[...], w1_ref[...],
                     preferred_element_type=jnp.float32) + b1

        inv_n = 1.0 / float(n_nodes)
        # masked column sums via MXU (padded rows excluded by the 0/1 mask row)
        mean = jnp.dot(mask_row, h1, preferred_element_type=jnp.float32) * inv_n
        diff = h1 - mean
        var = jnp.dot(mask_row, diff * diff,
                      preferred_element_type=jnp.float32) * inv_n  # biased (BN train)
        h1n = jnp.maximum(diff * lax.rsqrt(var + bn_eps) * gamma + beta, 0.0)

        x_new = jnp.maximum(
            jnp.dot(h1n, w2_ref[...], preferred_element_type=jnp.float32) + b2,
            0.0)
        x_cur[...] = x_new
        x_new_bf = x_new.astype(jnp.bfloat16)
        x_cur_bf[...] = x_new_bf

        # ---- after the last layer: global_add_pool + classifier ----
        @pl.when(l == num_layers - 1)
        def _classify():
            pooled = jnp.dot(pool_ref[...], x_new_bf,
                             preferred_element_type=jnp.float32)
            c1 = jnp.maximum(
                jnp.dot(pooled, cw1_ref[...],
                        preferred_element_type=jnp.float32) + cb1_ref[...],
                0.0)
            out_ref[...] = jnp.dot(c1, cw2_ref[...],
                                   preferred_element_type=jnp.float32) + cb2_ref[...]


# ----------------------------- wrapper ---------------------------------------


def _round_up(v, m):
    return (v + m - 1) // m * m


def _pad2(a, rows, cols):
    a = a.astype(jnp.float32)
    return jnp.pad(a, ((0, rows - a.shape[0]), (0, cols - a.shape[1])))


def _pack_layer_params(layer_params):
    we = jnp.stack([_pad2(p[0], PAD, PAD) for p in layer_params])
    w1 = jnp.stack([_pad2(p[2], PAD, PAD) for p in layer_params])
    w2 = jnp.stack([_pad2(p[6], PAD, PAD) for p in layer_params])
    vecs = []
    for p in layer_params:
        v = jnp.concatenate([
            _pad2(p[1], 1, PAD),                 # be
            _pad2(p[3], 1, PAD),                 # b1
            _pad2(p[4], 1, PAD),                 # gamma
            _pad2(p[5], 1, PAD),                 # beta
            _pad2(p[7], 1, PAD),                 # b2
            jnp.zeros((3, PAD), jnp.float32),    # padding rows
        ], axis=0)
        vecs.append(v)
    return we, w1, w2, jnp.stack(vecs)           # (L, 8, PAD)


def _const_spec(shape):
    rank = len(shape)
    return pl.BlockSpec(shape, lambda l, e, _r=rank: (0,) * _r)


def _pick_vmem_limit():
    # Raise the limit on 128 MiB chips (v5e/v6e); stay conservative on v7x (64 MiB).
    try:
        cap = pltpu.get_tpu_info().vmem_capacity_bytes
        return int(min(100 * 1024 * 1024, cap * 3 // 4))
    except Exception:
        return 64 * 1024 * 1024


def gine_forward(x, edge_index, edge_attr, batch, num_graphs,
                 layer_params, classifier_params, *,
                 eps=0.0, bn_eps=1e-5, edge_tile=512):
    n_nodes = x.shape[0]
    n_edges = edge_attr.shape[0]
    num_layers = len(layer_params)
    out_ch = classifier_params[2].shape[1]

    # lane-dense node axis: multiple of 128 (unmasked loads, full MXU K)
    np_ = _round_up(max(n_nodes, PAD), PAD)
    gp = _round_up(max(num_graphs, 16), 16)

    vmem_limit = _pick_vmem_limit()

    # edge tile: multiple of 128 (it is the lane dim of the transposed dst
    # incidence); auto-shrink so double-buffered edge-tile inputs + resident
    # scratch/weights fit comfortably in the VMEM budget (matters on v7x).
    edge_tile = max(128, _round_up(edge_tile, 128))
    resident = (np_ * PAD * (4 + 2 + 4)        # x_cur + x_cur_bf + aggr scratch
                + gp * np_ * 2                  # pool (resident, constant index)
                + 16 * PAD * PAD * 4)           # weights / classifier (approx)

    def _tile_bytes(te):
        # a_src (te*np_*2) + adst^T (np_*te*2) + eattr (te*PAD*4), double-buffered
        return 2 * (te * np_ * 4 + te * PAD * 4)

    while edge_tile > 128 and _tile_bytes(edge_tile) + resident > vmem_limit // 2:
        edge_tile //= 2
    edge_tile = max(128, (edge_tile // 128) * 128)
    edge_tile = min(edge_tile, _round_up(max(n_edges, 128), 128))
    ep = _round_up(n_edges, edge_tile)
    n_et = ep // edge_tile

    src, dst = edge_index[0], edge_index[1]
    # bf16 one-hot incidence matrices (0/1 exact in bf16; half the HBM bytes).
    # dst incidence stored pre-transposed so the scatter-add is a plain matmul.
    a_src = jnp.zeros((ep, np_), jnp.bfloat16).at[jnp.arange(n_edges), src].set(1)
    a_dst_t = jnp.zeros((np_, ep), jnp.bfloat16).at[dst, jnp.arange(n_edges)].set(1)
    pool = jnp.zeros((gp, np_), jnp.bfloat16).at[batch, jnp.arange(n_nodes)].set(1)

    x0 = _pad2(x, np_, PAD)
    ea = _pad2(edge_attr, ep, PAD)

    we, w1, w2, vecs = _pack_layer_params(layer_params)
    cw1 = _pad2(classifier_params[0], PAD, PAD)
    cb1 = _pad2(classifier_params[1], 1, PAD)
    cw2 = _pad2(classifier_params[2], PAD, PAD)
    cb2 = _pad2(classifier_params[3], 1, PAD)

    per_layer_mat = pl.BlockSpec((None, PAD, PAD), lambda l, e: (l, 0, 0))
    per_layer_vec = pl.BlockSpec((None, 8, PAD), lambda l, e: (l, 0, 0))

    in_specs = [
        pl.BlockSpec(memory_space=pl.ANY),                       # x0 (HBM, 1 DMA)
        pl.BlockSpec((edge_tile, np_), lambda l, e: (e, 0)),     # a_src
        pl.BlockSpec((np_, edge_tile), lambda l, e: (0, e)),     # a_dst^T
        pl.BlockSpec((edge_tile, PAD), lambda l, e: (e, 0)),     # edge_attr
        per_layer_mat,                                           # we
        per_layer_mat,                                           # w1
        per_layer_mat,                                           # w2
        per_layer_vec,                                           # [be,b1,gamma,beta,b2]
        _const_spec((gp, np_)),                                  # pool
        _const_spec((PAD, PAD)),                                 # cw1
        _const_spec((1, PAD)),                                   # cb1
        _const_spec((PAD, PAD)),                                 # cw2
        _const_spec((1, PAD)),                                   # cb2
    ]
    out_specs = _const_spec((gp, PAD))

    kernel = functools.partial(
        _fused_gine_kernel, eps=eps, bn_eps=bn_eps,
        n_nodes=n_nodes, num_layers=num_layers)

    flops = int(
        num_layers * (2 * ep * np_ * PAD          # gather matmul
                      + 2 * np_ * ep * PAD        # scatter matmul
                      + 2 * ep * PAD * PAD        # edge linear
                      + 4 * np_ * PAD * PAD       # MLP lin1 + lin2
                      + 4 * np_ * PAD)            # BN sum matmuls
        + 2 * gp * np_ * PAD + 4 * gp * PAD * PAD)  # pool + classifier
    bytes_accessed = int(
        num_layers * (a_src.nbytes + a_dst_t.nbytes + ea.nbytes)
        + x0.nbytes + pool.nbytes
        + we.nbytes + w1.nbytes + w2.nbytes + vecs.nbytes
        + cw1.nbytes + cb1.nbytes + cw2.nbytes + cb2.nbytes
        + gp * PAD * 4)
    cost = pl.CostEstimate(flops=flops,
                           transcendentals=num_layers * PAD,
                           bytes_accessed=bytes_accessed)

    out = pl.pallas_call(
        kernel,
        out_shape=jax.ShapeDtypeStruct((gp, PAD), jnp.float32),
        grid_spec=pltpu.PrefetchScalarGridSpec(
            num_scalar_prefetch=0,
            grid=(num_layers, n_et),
            in_specs=in_specs,
            out_specs=out_specs,
            scratch_shapes=[
                pltpu.VMEM((np_, PAD), jnp.float32),    # x_cur
                pltpu.VMEM((np_, PAD), jnp.bfloat16),   # x_cur_bf (hoisted cast)
                pltpu.VMEM((np_, PAD), jnp.float32),    # aggr
                pltpu.SemaphoreType.DMA(()),            # x0 copy semaphore
            ],
        ),
        compiler_params=pltpu.CompilerParams(
            # layer axis and edge-reduction axis both carry state -> arbitrary
            dimension_semantics=("arbitrary", "arbitrary"),
            vmem_limit_bytes=vmem_limit),
        cost_estimate=cost,
    )(x0, a_src, a_dst_t, ea, we, w1, w2, vecs, pool, cw1, cb1, cw2, cb2)

    return out[:num_graphs, :out_ch]


# ----------------------------- pure-JAX reference ----------------------------


def gine_reference(x, edge_index, edge_attr, batch, num_graphs,
                   layer_params, classifier_params, *, eps=0.0, bn_eps=1e-5):
    src, dst = edge_index[0], edge_index[1]
    h = x.astype(jnp.float32)
    for (we, be, w1, b1, gamma, beta, w2, b2) in layer_params:
        e = edge_attr @ we + be
        m = jnp.maximum(h[src] + e, 0.0)
        aggr = jnp.zeros_like(h).at[dst].add(m)
        z = (1.0 + eps) * h + aggr
        h1 = z @ w1 + b1
        mean = h1.mean(0, keepdims=True)
        var = ((h1 - mean) ** 2).mean(0, keepdims=True)
        h1 = (h1 - mean) / jnp.sqrt(var + bn_eps) * gamma + beta
        h1 = jnp.maximum(h1, 0.0)
        h = jnp.maximum(h1 @ w2 + b2, 0.0)
    pooled = jnp.zeros((num_graphs, h.shape[1]), jnp.float32).at[batch].add(h)
    c = jnp.maximum(pooled @ classifier_params[0] + classifier_params[1], 0.0)
    return c @ classifier_params[2] + classifier_params[3]


# ----------------------------- parameter init --------------------------------


def _linear_params(key, fan_in, fan_out):
    kw, kb = jax.random.split(key)
    w = jax.random.normal(kw, (fan_in, fan_out), jnp.float32) * 0.1
    b = jax.random.normal(kb, (1, fan_out), jnp.float32) * 0.01
    return w, b


def init_params(key, in_channels, hidden_channels, out_channels, num_layers,
                edge_dim):
    layer_params = []
    for i in range(num_layers):
        din = in_channels if i == 0 else hidden_channels
        key, k1, k2, k3 = jax.random.split(key, 4)
        we, be = _linear_params(k1, edge_dim, din)          # GINE edge lin
        w1, b1 = _linear_params(k2, din, hidden_channels)   # MLP lin 1
        gamma = jnp.ones((1, hidden_channels), jnp.float32)
        beta = jnp.zeros((1, hidden_channels), jnp.float32)
        w2, b2 = _linear_params(k3, hidden_channels, hidden_channels)  # MLP lin 2
        layer_params.append((we, be, w1, b1, gamma, beta, w2, b2))

    key, k1, k2 = jax.random.split(key, 3)
    cw1, cb1 = _linear_params(k1, hidden_channels, hidden_channels)
    cw2, cb2 = _linear_params(k2, hidden_channels, out_channels)
    classifier_params = (cw1, cb1, cw2, cb2)
    return layer_params, classifier_params


# ----------------------------- main ------------------------------------------


if __name__ == "__main__":
    in_channels = 8
    hidden_channels = 32
    out_channels = 4
    num_layers = 2
    edge_dim = 6

    num_nodes = 24
    num_edges = 300
    num_graphs = 2

    key = jax.random.PRNGKey(0)
    key, kx, ke, ksrc, kdst = jax.random.split(key, 5)

    x = jax.random.normal(kx, (num_nodes, in_channels), jnp.float32)
    edge_attr = jax.random.normal(ke, (num_edges, edge_dim), jnp.float32)
    src = jax.random.randint(ksrc, (num_edges,), 0, num_nodes, jnp.int32)
    dst = jax.random.randint(kdst, (num_edges,), 0, num_nodes, jnp.int32)
    edge_index = jnp.stack([src, dst], axis=0)
    # first half of nodes -> graph 0, second half -> graph 1
    batch = jnp.concatenate([
        jnp.zeros((num_nodes // 2,), jnp.int32),
        jnp.ones((num_nodes - num_nodes // 2,), jnp.int32),
    ])

    layer_params, classifier_params = init_params(
        key, in_channels, hidden_channels, out_channels, num_layers, edge_dim)

    # small edge_tile so the multi-tile edge-reduction path is exercised
    out = gine_forward(x, edge_index, edge_attr, batch, num_graphs,
                       layer_params, classifier_params, eps=0.0, edge_tile=128)
    out = jax.block_until_ready(out)

    ref = gine_reference(x, edge_index, edge_attr, batch, num_graphs,
                         layer_params, classifier_params, eps=0.0)

    assert out.shape == (num_graphs, out_channels)
    assert jnp.all(jnp.isfinite(out))
    # bf16 gather/scatter/pool path -> loose tolerance vs f32 reference
    assert jnp.allclose(out, ref, rtol=5e-2, atol=2e-2), (out, ref)
    print("KERNEL_OK")
</pallas_src>

<mosaic_0001>
module attributes {stable_mosaic.version = 11 : i64} {
  func.func @_fused_gine_kernel(%arg0: i32, %arg1: i32, %arg2: memref<128x128xf32, #tpu.memory_space<any>>, %arg3: memref<128x128xbf16, #tpu.memory_space<vmem>>, %arg4: memref<128x128xbf16, #tpu.memory_space<vmem>>, %arg5: memref<128x128xf32, #tpu.memory_space<vmem>>, %arg6: memref<1x128x128xf32, #tpu.memory_space<vmem>>, %arg7: memref<1x128x128xf32, #tpu.memory_space<vmem>>, %arg8: memref<1x128x128xf32, #tpu.memory_space<vmem>>, %arg9: memref<1x8x128xf32, #tpu.memory_space<vmem>>, %arg10: memref<16x128xbf16, #tpu.memory_space<vmem>>, %arg11: memref<128x128xf32, #tpu.memory_space<vmem>>, %arg12: memref<1x128xf32, #tpu.memory_space<vmem>>, %arg13: memref<128x128xf32, #tpu.memory_space<vmem>>, %arg14: memref<1x128xf32, #tpu.memory_space<vmem>>, %arg15: memref<16x128xf32, #tpu.memory_space<vmem>>, %arg16: memref<128x128xf32, #tpu.memory_space<vmem>>, %arg17: memref<128x128xbf16, #tpu.memory_space<vmem>>, %arg18: memref<128x128xf32, #tpu.memory_space<vmem>>, %arg19: memref<!tpu.dma_semaphore, #tpu.memory_space<semaphore_mem>>) attributes {dimension_semantics = [#tpu.dimension_semantics<arbitrary>, #tpu.dimension_semantics<arbitrary>], iteration_bounds = array<i64: 2, 3>, scalar_prefetch = 0 : i64, scratch_operands = 4 : i64, tpu.core_type = #tpu.core_type<tc>, window_params = [{}, {transform_indices = @transform_1, window_bounds = array<i64: 128, 128>}, {transform_indices = @transform_2, window_bounds = array<i64: 128, 128>}, {transform_indices = @transform_3, window_bounds = array<i64: 128, 128>}, {transform_indices = @transform_4, window_bounds = array<i64: 1, 128, 128>}, {transform_indices = @transform_5, window_bounds = array<i64: 1, 128, 128>}, {transform_indices = @transform_6, window_bounds = array<i64: 1, 128, 128>}, {transform_indices = @transform_7, window_bounds = array<i64: 1, 8, 128>}, {pipeline_mode = #tpu.pipeline_mode<synchronous>, transform_indices = @transform_8, window_bounds = array<i64: 16, 128>}, {pipeline_mode = #tpu.pipeline_mode<synchronous>, transform_indices = @transform_9, window_bounds = array<i64: 128, 128>}, {pipeline_mode = #tpu.pipeline_mode<synchronous>, transform_indices = @transform_10, window_bounds = array<i64: 1, 128>}, {pipeline_mode = #tpu.pipeline_mode<synchronous>, transform_indices = @transform_11, window_bounds = array<i64: 128, 128>}, {pipeline_mode = #tpu.pipeline_mode<synchronous>, transform_indices = @transform_12, window_bounds = array<i64: 1, 128>}, {pipeline_mode = #tpu.pipeline_mode<synchronous>, transform_indices = @transform_13, window_bounds = array<i64: 16, 128>}]} {
    %c0_i32 = arith.constant 0 : i32
    %0 = arith.cmpi eq, %arg0, %c0_i32 : i32
    %c0_i32_0 = arith.constant 0 : i32
    %1 = arith.cmpi eq, %arg1, %c0_i32_0 : i32
    %2 = arith.andi %0, %1 : i1
    %3 = arith.extui %2 : i1 to i32
    %c0_i32_1 = arith.constant 0 : i32
    %4 = arith.cmpi ne, %3, %c0_i32_1 : i32
    scf.if %4 {
      tpu.enqueue_dma source(%arg2 : memref<128x128xf32, #tpu.memory_space<any>>) target(%arg16 : memref<128x128xf32, #tpu.memory_space<vmem>>) target_semaphore(%arg19 : memref<!tpu.dma_semaphore, #tpu.memory_space<semaphore_mem>>)
      tpu.wait_dma2 semaphore(%arg19 : memref<!tpu.dma_semaphore, #tpu.memory_space<semaphore_mem>>) src(%arg2 : memref<128x128xf32, #tpu.memory_space<any>>) dst(%arg16 : memref<128x128xf32, #tpu.memory_space<vmem>>)
      %c0_25 = arith.constant 0 : index
      %c0_26 = arith.constant 0 : index
      %32 = vector.load %arg16[%c0_25, %c0_26] : memref<128x128xf32, #tpu.memory_space<vmem>>, vector<128x128xf32>
      %33 = arith.truncf %32 : vector<128x128xf32> to vector<128x128xbf16>
      %c0_27 = arith.constant 0 : index
      %c0_28 = arith.constant 0 : index
      %34 = vector.load %arg17[%c0_27, %c0_28] : memref<128x128xbf16, #tpu.memory_space<vmem>>, vector<128x128xbf16>
      tpu.vector_store %arg17[%c0_27, %c0_28], %33 {strides = array<i32>} : memref<128x128xbf16, #tpu.memory_space<vmem>>, vector<128x128xbf16>,
    } else {
    }
    %c0_i32_2 = arith.constant 0 : i32
    %5 = arith.cmpi eq, %arg1, %c0_i32_2 : i32
    %6 = arith.extui %5 : i1 to i32
    %c0_i32_3 = arith.constant 0 : i32
    %7 = arith.cmpi ne, %6, %c0_i32_3 : i32
    scf.if %7 {
      %cst_25 = arith.constant 0.000000e+00 : f32
      %32 = vector.broadcast %cst_25 : f32 to vector<128x128xf32>
      %c0_26 = arith.constant 0 : index
      %c0_27 = arith.constant 0 : index
      %33 = vector.load %arg18[%c0_26, %c0_27] : memref<128x128xf32, #tpu.memory_space<vmem>>, vector<128x128xf32>
      tpu.vector_store %arg18[%c0_26, %c0_27], %32 {strides = array<i32>} : memref<128x128xf32, #tpu.memory_space<vmem>>, vector<128x128xf32>,
    } else {
    }
    %c0 = arith.constant 0 : index
    %c0_4 = arith.constant 0 : index
    %c0_5 = arith.constant 0 : index
    %8 = vector.load %arg9[%c0, %c0_4, %c0_5] : memref<1x8x128xf32, #tpu.memory_space<vmem>>, vector<1x8x128xf32>
    %9 = vector.shape_cast %8 : vector<1x8x128xf32> to vector<8x128xf32>
    %10 = vector.extract_strided_slice %9 {offsets = [0, 0], sizes = [1, 128], strides = [1, 1]} : vector<8x128xf32> to vector<1x128xf32>
    %c0_6 = arith.constant 0 : index
    %c0_7 = arith.constant 0 : index
    %11 = vector.load %arg3[%c0_6, %c0_7] : memref<128x128xbf16, #tpu.memory_space<vmem>>, vector<128x128xbf16>
    %c0_8 = arith.constant 0 : index
    %c0_9 = arith.constant 0 : index
    %12 = vector.load %arg17[%c0_8, %c0_9] : memref<128x128xbf16, #tpu.memory_space<vmem>>, vector<128x128xbf16>
    %cst = arith.constant dense<0.000000e+00> : vector<128x128xf32>
    %13 = tpu.matmul %11, %12, %cst {dimension_numbers = #tpu.dot_dimension_numbers<[1], [0], [0], [1], [0, 0, 1, 1], [], []>} : vector<128x128xbf16>, vector<128x128xbf16>, vector<128x128xf32> -> vector<128x128xf32>
    %c0_10 = arith.constant 0 : index
    %c0_11 = arith.constant 0 : index
    %14 = vector.load %arg5[%c0_10, %c0_11] : memref<128x128xf32, #tpu.memory_space<vmem>>, vector<128x128xf32>
    %c0_12 = arith.constant 0 : index
    %c0_13 = arith.constant 0 : index
    %c0_14 = arith.constant 0 : index
    %15 = vector.load %arg6[%c0_12, %c0_13, %c0_14] : memref<1x128x128xf32, #tpu.memory_space<vmem>>, vector<1x128x128xf32>
    %16 = vector.shape_cast %15 : vector<1x128x128xf32> to vector<128x128xf32>
    %cst_15 = arith.constant dense<0.000000e+00> : vector<128x128xf32>
    %17 = tpu.matmul %14, %16, %cst_15 {dimension_numbers = #tpu.dot_dimension_numbers<[1], [0], [0], [1], [0, 0, 1, 1], [], []>} : vector<128x128xf32>, vector<128x128xf32>, vector<128x128xf32> -> vector<128x128xf32>
    %18 = vector.broadcast %10 : vector<1x128xf32> to vector<128x128xf32>
    %19 = arith.addf %17, %18 : vector<128x128xf32>
    %20 = arith.addf %13, %19 : vector<128x128xf32>
    %cst_16 = arith.constant 0.000000e+00 : f32
    %21 = vector.broadcast %cst_16 : f32 to vector<128x128xf32>
    %22 = arith.maximumf %20, %21 : vector<128x128xf32>
    %23 = arith.truncf %22 : vector<128x128xf32> to vector<128x128xbf16>
    %c0_17 = arith.constant 0 : index
    %c0_18 = arith.constant 0 : index
    %24 = vector.load %arg18[%c0_17, %c0_18] : memref<128x128xf32, #tpu.memory_space<vmem>>, vector<128x128xf32>
    %c0_19 = arith.constant 0 : index
    %c0_20 = arith.constant 0 : index
    %25 = vector.load %arg4[%c0_19, %c0_20] : memref<128x128xbf16, #tpu.memory_space<vmem>>, vector<128x128xbf16>
    %cst_21 = arith.constant dense<0.000000e+00> : vector<128x128xf32>
    %26 = tpu.matmul %25, %23, %cst_21 {dimension_numbers = #tpu.dot_dimension_numbers<[1], [0], [0], [1], [0, 0, 1, 1], [], []>} : vector<128x128xbf16>, vector<128x128xbf16>, vector<128x128xf32> -> vector<128x128xf32>
    %27 = arith.addf %24, %26 : vector<128x128xf32>
    %c0_22 = arith.constant 0 : index
    %c0_23 = arith.constant 0 : index
    %28 = vector.load %arg18[%c0_22, %c0_23] : memref<128x128xf32, #tpu.memory_space<vmem>>, vector<128x128xf32>
    tpu.vector_store %arg18[%c0_22, %c0_23], %27 {strides = array<i32>} : memref<128x128xf32, #tpu.memory_space<vmem>>, vector<128x128xf32>,
    %c2_i32 = arith.constant 2 : i32
    %29 = arith.cmpi eq, %arg1, %c2_i32 : i32
    %30 = arith.extui %29 : i1 to i32
    %c0_i32_24 = arith.constant 0 : i32
    %31 = arith.cmpi ne, %30, %c0_i32_24 : i32
    scf.if %31 {
      %32 = vector.extract_strided_slice %9 {offsets = [1, 0], sizes = [1, 128], strides = [1, 1]} : vector<8x128xf32> to vector<1x128xf32>
      %33 = vector.extract_strided_slice %9 {offsets = [2, 0], sizes = [1, 128], strides = [1, 1]} : vector<8x128xf32> to vector<1x128xf32>
      %34 = vector.extract_strided_slice %9 {offsets = [3, 0], sizes = [1, 128], strides = [1, 1]} : vector<8x128xf32> to vector<1x128xf32>
      %35 = vector.extract_strided_slice %9 {offsets = [4, 0], sizes = [1, 128], strides = [1, 1]} : vector<8x128xf32> to vector<1x128xf32>
      %36 = tpu.iota {dimensions = array<i32: 1>} : vector<1x128xi32>
      %c24_i32 = arith.constant 24 : i32
      %37 = vector.broadcast %c24_i32 : i32 to vector<1x128xi32>
      %38 = arith.cmpi slt, %36, %37 : vector<1x128xi32>
      %39 = arith.extui %38 : vector<1x128xi1> to vector<1x128xi32>
      %40 = arith.sitofp %39 : vector<1x128xi32> to vector<1x128xf32>
      %c0_25 = arith.constant 0 : index
      %c0_26 = arith.constant 0 : index
      %41 = vector.load %arg16[%c0_25, %c0_26] : memref<128x128xf32, #tpu.memory_space<vmem>>, vector<128x128xf32>
      %cst_27 = arith.constant 1.000000e+00 : f32
      %42 = vector.broadcast %cst_27 : f32 to vector<128x128xf32>
      %43 = arith.mulf %42, %41 : vector<128x128xf32>
      %c0_28 = arith.constant 0 : index
      %c0_29 = arith.constant 0 : index
      %44 = vector.load %arg18[%c0_28, %c0_29] : memref<128x128xf32, #tpu.memory_space<vmem>>, vector<128x128xf32>
      %45 = arith.addf %43, %44 : vector<128x128xf32>
      %c0_30 = arith.constant 0 : index
      %c0_31 = arith.constant 0 : index
      %46 = vector.load %arg18[%c0_30, %c0_31] : memref<128x128xf32, #tpu.memory_space<vmem>>, vector<128x128xf32>
      tpu.vector_store %arg18[%c0_30, %c0_31], %45 {strides = array<i32>} : memref<128x128xf32, #tpu.memory_space<vmem>>, vector<128x128xf32>,
      %c0_32 = arith.constant 0 : index
      %c0_33 = arith.constant 0 : index
      %47 = vector.load %arg18[%c0_32, %c0_33] : memref<128x128xf32, #tpu.memory_space<vmem>>, vector<128x128xf32>
      %c0_34 = arith.constant 0 : index
      %c0_35 = arith.constant 0 : index
      %c0_36 = arith.constant 0 : index
      %48 = vector.load %arg7[%c0_34, %c0_35, %c0_36] : memref<1x128x128xf32, #tpu.memory_space<vmem>>, vector<1x128x128xf32>
      %49 = vector.shape_cast %48 : vector<1x128x128xf32> to vector<128x128xf32>
      %cst_37 = arith.constant dense<0.000000e+00> : vector<128x128xf32>
      %50 = tpu.matmul %47, %49, %cst_37 {dimension_numbers = #tpu.dot_dimension_numbers<[1], [0], [0], [1], [0, 0, 1, 1], [], []>} : vector<128x128xf32>, vector<128x128xf32>, vector<128x128xf32> -> vector<128x128xf32>
      %51 = vector.broadcast %32 : vector<1x128xf32> to vector<128x128xf32>
      %52 = arith.addf %50, %51 : vector<128x128xf32>
      %cst_38 = arith.constant dense<0.000000e+00> : vector<1x128xf32>
      %53 = tpu.matmul %40, %52, %cst_38 {dimension_numbers = #tpu.dot_dimension_numbers<[1], [0], [0], [1], [0, 0, 1, 1], [], []>} : vector<1x128xf32>, vector<128x128xf32>, vector<1x128xf32> -> vector<1x128xf32>
      %cst_39 = arith.constant 0.0416666679 : f32
      %54 = vector.broadcast %cst_39 : f32 to vector<1x128xf32>
      %55 = arith.mulf %53, %54 : vector<1x128xf32>
      %56 = vector.broadcast %55 : vector<1x128xf32> to vector<128x128xf32>
      %57 = arith.subf %52, %56 : vector<128x128xf32>
      %58 = arith.mulf %57, %57 : vector<128x128xf32>
      %cst_40 = arith.constant dense<0.000000e+00> : vector<1x128xf32>
      %59 = tpu.matmul %40, %58, %cst_40 {dimension_numbers = #tpu.dot_dimension_numbers<[1], [0], [0], [1], [0, 0, 1, 1], [], []>} : vector<1x128xf32>, vector<128x128xf32>, vector<1x128xf32> -> vector<1x128xf32>
      %cst_41 = arith.constant 0.0416666679 : f32
      %60 = vector.broadcast %cst_41 : f32 to vector<1x128xf32>
      %61 = arith.mulf %59, %60 : vector<1x128xf32>
      %cst_42 = arith.constant 9.99999974E-6 : f32
      %62 = vector.broadcast %cst_42 : f32 to vector<1x128xf32>
      %63 = arith.addf %61, %62 : vector<1x128xf32>
      %64 = math.rsqrt %63 : vector<1x128xf32>
      %65 = vector.broadcast %64 : vector<1x128xf32> to vector<128x128xf32>
      %66 = arith.mulf %57, %65 : vector<128x128xf32>
      %67 = vector.broadcast %33 : vector<1x128xf32> to vector<128x128xf32>
      %68 = arith.mulf %66, %67 : vector<128x128xf32>
      %69 = vector.broadcast %34 : vector<1x128xf32> to vector<128x128xf32>
      %70 = arith.addf %68, %69 : vector<128x128xf32>
      %cst_43 = arith.constant 0.000000e+00 : f32
      %71 = vector.broadcast %cst_43 : f32 to vector<128x128xf32>
      %72 = arith.maximumf %70, %71 : vector<128x128xf32>
      %c0_44 = arith.constant 0 : index
      %c0_45 = arith.constant 0 : index
      %c0_46 = arith.constant 0 : index
      %73 = vector.load %arg8[%c0_44, %c0_45, %c0_46] : memref<1x128x128xf32, #tpu.memory_space<vmem>>, vector<1x128x128xf32>
      %74 = vector.shape_cast %73 : vector<1x128x128xf32> to vector<128x128xf32>
      %cst_47 = arith.constant dense<0.000000e+00> : vector<128x128xf32>
      %75 = tpu.matmul %72, %74, %cst_47 {dimension_numbers = #tpu.dot_dimension_numbers<[1], [0], [0], [1], [0, 0, 1, 1], [], []>} : vector<128x128xf32>, vector<128x128xf32>, vector<128x128xf32> -> vector<128x128xf32>
      %76 = vector.broadcast %35 : vector<1x128xf32> to vector<128x128xf32>
      %77 = arith.addf %75, %76 : vector<128x128xf32>
      %cst_48 = arith.constant 0.000000e+00 : f32
      %78 = vector.broadcast %cst_48 : f32 to vector<128x128xf32>
      %79 = arith.maximumf %77, %78 : vector<128x128xf32>
      %c0_49 = arith.constant 0 : index
      %c0_50 = arith.constant 0 : index
      %80 = vector.load %arg16[%c0_49, %c0_50] : memref<128x128xf32, #tpu.memory_space<vmem>>, vector<128x128xf32>
      tpu.vector_store %arg16[%c0_49, %c0_50], %79 {strides = array<i32>} : memref<128x128xf32, #tpu.memory_space<vmem>>, vector<128x128xf32>,
      %81 = arith.truncf %79 : vector<128x128xf32> to vector<128x128xbf16>
      %c0_51 = arith.constant 0 : index
      %c0_52 = arith.constant 0 : index
      %82 = vector.load %arg17[%c0_51, %c0_52] : memref<128x128xbf16, #tpu.memory_space<vmem>>, vector<128x128xbf16>
      tpu.vector_store %arg17[%c0_51, %c0_52], %81 {strides = array<i32>} : memref<128x128xbf16, #tpu.memory_space<vmem>>, vector<128x128xbf16>,
      %c1_i32 = arith.constant 1 : i32
      %83 = arith.cmpi eq, %arg0, %c1_i32 : i32
      %84 = arith.extui %83 : i1 to i32
      %c0_i32_53 = arith.constant 0 : i32
      %85 = arith.cmpi ne, %84, %c0_i32_53 : i32
      scf.if %85 {
        %c0_54 = arith.constant 0 : index
        %c0_55 = arith.constant 0 : index
        %86 = vector.load %arg10[%c0_54, %c0_55] : memref<16x128xbf16, #tpu.memory_space<vmem>>, vector<16x128xbf16>
        %cst_56 = arith.constant dense<0.000000e+00> : vector<16x128xf32>
        %87 = tpu.matmul %86, %81, %cst_56 {dimension_numbers = #tpu.dot_dimension_numbers<[1], [0], [0], [1], [0, 0, 1, 1], [], []>} : vector<16x128xbf16>, vector<128x128xbf16>, vector<16x128xf32> -> vector<16x128xf32>
        %c0_57 = arith.constant 0 : index
        %c0_58 = arith.constant 0 : index
        %88 = vector.load %arg11[%c0_57, %c0_58] : memref<128x128xf32, #tpu.memory_space<vmem>>, vector<128x128xf32>
        %cst_59 = arith.constant dense<0.000000e+00> : vector<16x128xf32>
        %89 = tpu.matmul %87, %88, %cst_59 {dimension_numbers = #tpu.dot_dimension_numbers<[1], [0], [0], [1], [0, 0, 1, 1], [], []>} : vector<16x128xf32>, vector<128x128xf32>, vector<16x128xf32> -> vector<16x128xf32>
        %c0_60 = arith.constant 0 : index
        %c0_61 = arith.constant 0 : index
        %90 = vector.load %arg12[%c0_60, %c0_61] : memref<1x128xf32, #tpu.memory_space<vmem>>, vector<1x128xf32>
        %91 = vector.broadcast %90 : vector<1x128xf32> to vector<16x128xf32>
        %92 = arith.addf %89, %91 : vector<16x128xf32>
        %cst_62 = arith.constant 0.000000e+00 : f32
        %93 = vector.broadcast %cst_62 : f32 to vector<16x128xf32>
        %94 = arith.maximumf %92, %93 : vector<16x128xf32>
        %c0_63 = arith.constant 0 : index
        %c0_64 = arith.constant 0 : index
        %95 = vector.load %arg13[%c0_63, %c0_64] : memref<128x128xf32, #tpu.memory_space<vmem>>, vector<128x128xf32>
        %cst_65 = arith.constant dense<0.000000e+00> : vector<16x128xf32>
        %96 = tpu.matmul %94, %95, %cst_65 {dimension_numbers = #tpu.dot_dimension_numbers<[1], [0], [0], [1], [0, 0, 1, 1], [], []>} : vector<16x128xf32>, vector<128x128xf32>, vector<16x128xf32> -> vector<16x128xf32>
        %c0_66 = arith.constant 0 : index
        %c0_67 = arith.constant 0 : index
        %97 = vector.load %arg14[%c0_66, %c0_67] : memref<1x128xf32, #tpu.memory_space<vmem>>, vector<1x128xf32>
        %98 = vector.broadcast %97 : vector<1x128xf32> to vector<16x128xf32>
        %99 = arith.addf %96, %98 : vector<16x128xf32>
        %c0_68 = arith.constant 0 : index
        %c0_69 = arith.constant 0 : index
        %100 = vector.load %arg15[%c0_68, %c0_69] : memref<16x128xf32, #tpu.memory_space<vmem>>, vector<16x128xf32>
        tpu.vector_store %arg15[%c0_68, %c0_69], %99 {strides = array<i32>} : memref<16x128xf32, #tpu.memory_space<vmem>>, vector<16x128xf32>,
      } else {
      }
    } else {
    }
    return
  }
  func.func @transform_1(%arg0: i32, %arg1: i32) -> (i32, i32) {
    %c0_i32 = arith.constant 0 : i32
    %c0_i32_0 = arith.constant 0 : i32
    return %arg1, %c0_i32 : i32, i32
  }
  func.func @transform_2(%arg0: i32, %arg1: i32) -> (i32, i32) {
    %c0_i32 = arith.constant 0 : i32
    %c0_i32_0 = arith.constant 0 : i32
    return %c0_i32, %arg1 : i32, i32
  }
  func.func @transform_3(%arg0: i32, %arg1: i32) -> (i32, i32) {
    %c0_i32 = arith.constant 0 : i32
    %c0_i32_0 = arith.constant 0 : i32
    return %arg1, %c0_i32 : i32, i32
  }
  func.func @transform_4(%arg0: i32, %arg1: i32) -> (i32, i32, i32) {
    %c0_i32 = arith.constant 0 : i32
    %c0_i32_0 = arith.constant 0 : i32
    %c0_i32_1 = arith.constant 0 : i32
    return %arg0, %c0_i32, %c0_i32_0 : i32, i32, i32
  }
  func.func @transform_5(%arg0: i32, %arg1: i32) -> (i32, i32, i32) {
    %c0_i32 = arith.constant 0 : i32
    %c0_i32_0 = arith.constant 0 : i32
    %c0_i32_1 = arith.constant 0 : i32
    return %arg0, %c0_i32, %c0_i32_0 : i32, i32, i32
  }
  func.func @transform_6(%arg0: i32, %arg1: i32) -> (i32, i32, i32) {
    %c0_i32 = arith.constant 0 : i32
    %c0_i32_0 = arith.constant 0 : i32
    %c0_i32_1 = arith.constant 0 : i32
    return %arg0, %c0_i32, %c0_i32_0 : i32, i32, i32
  }
  func.func @transform_7(%arg0: i32, %arg1: i32) -> (i32, i32, i32) {
    %c0_i32 = arith.constant 0 : i32
    %c0_i32_0 = arith.constant 0 : i32
    %c0_i32_1 = arith.constant 0 : i32
    return %arg0, %c0_i32, %c0_i32_0 : i32, i32, i32
  }
  func.func @transform_8(%arg0: i32, %arg1: i32) -> (i32, i32) {
    %c0_i32 = arith.constant 0 : i32
    %c0_i32_0 = arith.constant 0 : i32
    %c0_i32_1 = arith.constant 0 : i32
    return %c0_i32, %c0_i32_0 : i32, i32
  }
  func.func @transform_9(%arg0: i32, %arg1: i32) -> (i32, i32) {
    %c0_i32 = arith.constant 0 : i32
    %c0_i32_0 = arith.constant 0 : i32
    %c0_i32_1 = arith.constant 0 : i32
    return %c0_i32, %c0_i32_0 : i32, i32
  }
  func.func @transform_10(%arg0: i32, %arg1: i32) -> (i32, i32) {
    %c0_i32 = arith.constant 0 : i32
    %c0_i32_0 = arith.constant 0 : i32
    %c0_i32_1 = arith.constant 0 : i32
    return %c0_i32, %c0_i32_0 : i32, i32
  }
  func.func @transform_11(%arg0: i32, %arg1: i32) -> (i32, i32) {
    %c0_i32 = arith.constant 0 : i32
    %c0_i32_0 = arith.constant 0 : i32
    %c0_i32_1 = arith.constant 0 : i32
    return %c0_i32, %c0_i32_0 : i32, i32
  }
  func.func @transform_12(%arg0: i32, %arg1: i32) -> (i32, i32) {
    %c0_i32 = arith.constant 0 : i32
    %c0_i32_0 = arith.constant 0 : i32
    %c0_i32_1 = arith.constant 0 : i32
    return %c0_i32, %c0_i32_0 : i32, i32
  }
  func.func @transform_13(%arg0: i32, %arg1: i32) -> (i32, i32) {
    %c0_i32 = arith.constant 0 : i32
    %c0_i32_0 = arith.constant 0 : i32
    %c0_i32_1 = arith.constant 0 : i32
    return %c0_i32, %c0_i32_0 : i32, i32
  }
}

</mosaic_0001>

<llo_original>
// kernel: tpu_custom_call.1
$region0: #{tpu_custom_call.1}
  #allocation0 [shape = 'u32[]', space=smem, size = 0x4, offset = 0x4, fixed_abs, tag = 'smem constant byte address 0x4 - core index']
  #allocation1 [shape = 'u32[144,128]{1,0:T(1,128)}', space=vmem, size = 0x12000, scoped, tag = 'internal scratch']
  #allocation2 [shape = 'f32[128,128]{1,0:T(8,128)}', space=vmem, size = 0x10000, scoped, tag = 'scratch operand']
  #allocation3 [shape = 'bf16[128,128]{1,0:T(16,128)(2,1)}', space=vmem, size = 0x8000, scoped, tag = 'scratch operand']
  #allocation4 [shape = 'f32[128,128]{1,0:T(8,128)}', space=vmem, size = 0x10000, scoped, tag = 'scratch operand']
  #allocation5 [shape = 's32[1]{0}', space=sflag, size = 0x4, scoped, tag = 'scratch operand']
  #allocation27 [shape = 's32[]', space=sflag, size = 0x4, offset = 0, fixed_abs, tag = 'sflag constant byte address 0x0 - dummy sync flag']
  #allocation28 [shape = 's32[]', space=sflag, size = 0x4, offset = 0, fixed_abs, tag = 'sflag constant byte address 0x0 - dummy sync flag']
  #allocation29 [shape = 'u32[]', space=smem, size = 0x4, offset = 0x44, fixed_abs, tag = 'smem constant byte address 0x44 - assertion arg 0']
  #allocation30 [shape = 'u32[]', space=smem, size = 0x4, offset = 0x48, fixed_abs, tag = 'smem constant byte address 0x48 - assertion arg 1']
  %s0 = inlined_call_operand.hbm [shape: f32[128,128], index: 0, kind: input, shape index: {}]
  %s1 = inlined_call_operand.hbm [shape: bf16[384,128], index: 1, kind: input, shape index: {}]
  %s2 = inlined_call_operand.hbm [shape: bf16[128,384], index: 2, kind: input, shape index: {}]
  %s3 = inlined_call_operand.hbm [shape: f32[384,128], index: 3, kind: input, shape index: {}]
  %s4 = inlined_call_operand.hbm [shape: f32[2,128,128], index: 4, kind: input, shape index: {}]
  %s5 = inlined_call_operand.hbm [shape: f32[2,128,128], index: 5, kind: input, shape index: {}]
  %s6 = inlined_call_operand.hbm [shape: f32[2,128,128], index: 6, kind: input, shape index: {}]
  %s7 = inlined_call_operand.hbm [shape: f32[2,8,128], index: 7, kind: input, shape index: {}]
  %s8 = inlined_call_operand.hbm [shape: bf16[16,128], index: 8, kind: input, shape index: {}]
  %s9 = inlined_call_operand.hbm [shape: f32[128,128], index: 9, kind: input, shape index: {}]
  %s10 = inlined_call_operand.hbm [shape: f32[1,128], index: 10, kind: input, shape index: {}]
  %s11 = inlined_call_operand.hbm [shape: f32[128,128], index: 11, kind: input, shape index: {}]
  %s12 = inlined_call_operand.hbm [shape: f32[1,128], index: 12, kind: input, shape index: {}]
  %s13 = inlined_call_operand.hbm [shape: f32[16,128], index: 13, kind: output, shape index: {}]
  %s14 = sld [smem:[#allocation0]]
  $region149: #{tpu_custom_call.1} parent=0
    _
  %s16 = ssub.s32 1, %s14
  %s17 = scalar_select 0, %s16, %s14
  $region1: #{tpu_custom_call.1} parent=0
    #allocation6 [shape = 'u8[65536]{0}', space=vmem, size = 0x10000, scoped, tag = 'input window, operand 1']
    #allocation7 [shape = 's32[2]{0}', space=sflag, size = 0x8, scoped, tag = 'scoped memory for tpu_custom_call.1']
    #allocation8 [shape = 's32[2]{0}', space=sflag, size = 0x8, scoped, tag = 'scoped memory for tpu_custom_call.1']
    #allocation9 [shape = 'u8[65536]{0}', space=vmem, size = 0x10000, scoped, tag = 'input window, operand 2']
    #allocation10 [shape = 's32[2]{0}', space=sflag, size = 0x8, scoped, tag = 'scoped memory for tpu_custom_call.1']
    #allocation11 [shape = 'u8[131072]{0}', space=vmem, size = 0x20000, scoped, tag = 'input window, operand 3']
    #allocation12 [shape = 'u8[131072]{0}', space=vmem, size = 0x20000, scoped, tag = 'input window, operand 4']
    #allocation13 [shape = 's32[2]{0}', space=sflag, size = 0x8, scoped, tag = 'scoped memory for tpu_custom_call.1']
    #allocation14 [shape = 'u8[131072]{0}', space=vmem, size = 0x20000, scoped, tag = 'input window, operand 5']
    #allocation15 [shape = 'u8[131072]{0}', space=vmem, size = 0x20000, scoped, tag = 'input window, operand 6']
    #allocation16 [shape = 's32[2]{0}', space=sflag, size = 0x8, scoped, tag = 'scoped memory for tpu_custom_call.1']
    #allocation17 [shape = 'u8[8192]{0}', space=vmem, size = 0x2000, scoped, tag = 'input window, operand 7']
    #allocation18 [shape = 'u8[4096]{0}', space=vmem, size = 0x1000, scoped, tag = 'input window, operand 8, single buffered']
    #allocation19 [shape = 's32[1]{0}', space=sflag, size = 0x4, scoped, tag = 'scoped memory for tpu_custom_call.1']
    #allocation20 [shape = 'u8[65536]{0}', space=vmem, size = 0x10000, scoped, tag = 'input window, operand 9, single buffered']
    #allocation21 [shape = 'u8[512]{0}', space=vmem, size = 0x400, scoped, tag = 'input window, operand 10, single buffered']
    #allocation22 [shape = 's32[1]{0}', space=sflag, size = 0x4, scoped, tag = 'scoped memory for tpu_custom_call.1']
    #allocation23 [shape = 'u8[65536]{0}', space=vmem, size = 0x10000, scoped, tag = 'input window, operand 11, single buffered']
    #allocation24 [shape = 'u8[512]{0}', space=vmem, size = 0x400, scoped, tag = 'input window, operand 12, single buffered']
    #allocation25 [shape = 's32[1]{0}', space=sflag, size = 0x4, scoped, tag = 'scoped memory for tpu_custom_call.1']
    #allocation26 [shape = 'u8[8192]{0}', space=vmem, size = 0x2000, scoped, tag = 'output window, operand 0, single buffered']
    %18 = vsyncpa [#allocation7], 0
    %s19 = scalar_lea.sflag [#allocation7], 1
    %20 = vsyncpa %s19, 0
    %21 = vsyncpa [#allocation10], 0
    %s22 = scalar_lea.sflag [#allocation10], 1
    %23 = vsyncpa %s22, 0
    %24 = vsyncpa [#allocation13], 0
    %s25 = scalar_lea.sflag [#allocation13], 1
    %26 = vsyncpa %s25, 0
    %27 = vsyncpa [#allocation16], 0
    %s28 = scalar_lea.sflag [#allocation16], 1
    %29 = vsyncpa %s28, 0
    %30 = vsyncpa [#allocation19], 0
    %31 = vsyncpa [#allocation22], 0
    %32 = vsyncpa [#allocation25], 0
    %33 = vsyncpa [#allocation8], 0
    loop: start=0, step=1, limit=8
    $region2: #{tpu_custom_call.1} parent=1 // loop_pre_header
      _
    $region3: #{tpu_custom_call.1} parent=1 // loop_header
      %s35 = sphi 0, %s39
      %p36 = scmp.ge.s32.totalorder %s35, 8
      %s42 = sphi 0, %s54
      %s43 = sphi 0, %s50
      %s44 = sphi 0, %s42
      %s45 = sphi 0, %s43
      %s46 = sphi 0, %s44
      %s47 = sphi 0, %s45
      %s57 = sphi 0, %s59
      %s60 = sphi 0, %s57
      %s61 = sphi 0, %s60
      %s77 = sphi 0, %s61
      %s83 = sphi 0, %s85
      %s86 = sphi 0, %s83
      %s87 = sphi 0, %s86
      %s103 = sphi 0, %s87
      %s109 = sphi 0, %s111
      %s112 = sphi 0, %s109
      %s113 = sphi 0, %s112
      %s129 = sphi 0, %s113
      %s135 = sphi 0, %s137
      %s138 = sphi 0, %s135
      %s139 = sphi 0, %s138
      %s155 = sphi 0, %s139
      %s161 = sphi 0, %s163
      %s164 = sphi 0, %s161
      %s165 = sphi 0, %s164
      %s181 = sphi 0, %s165
      %s187 = sphi 0, %s189
      %s190 = sphi 0, %s187
      %s191 = sphi 0, %s190
      %s207 = sphi 0, %s191
      %s213 = sphi 0, %s215
      %s216 = sphi 0, %s213
      %s217 = sphi 0, %s216
      %s233 = sphi 0, %s217
      %s237 = sphi 0, %s237
      %s239 = sphi 0, %s237
      %s240 = sphi 0, %s239
      %s254 = sphi 0, %s240
      %s258 = sphi 0, %s258
      %s260 = sphi 0, %s258
      %s261 = sphi 0, %s260
      %s275 = sphi 0, %s261
      %s279 = sphi 0, %s279
      %s281 = sphi 0, %s279
      %s282 = sphi 0, %s281
      %s296 = sphi 0, %s282
      %s300 = sphi 0, %s300
      %s302 = sphi 0, %s300
      %s303 = sphi 0, %s302
      %s317 = sphi 0, %s303
      %s321 = sphi 0, %s321
      %s323 = sphi 0, %s321
      %s324 = sphi 0, %s323
      %s338 = sphi 0, %s324
      %s342 = sphi 0, %s342
      %s344 = sphi 0, %s342
      %s345 = sphi 0, %s344
      %s359 = sphi 0, %s345
    $region4: #{tpu_custom_call.1} parent=1 // loop_header_branch
      %38 = sbr.rel (%p36) target = $region8
    $region5: #{tpu_custom_call.1} parent=1 // loop_body
      %s40 = ssub.s32 %s35, 1
      %s41 = ssub.s32 %s35, 2
      %s48 = sadd.s32 1, %s43
      %p49 = scmp.ge.s32.totalorder %s48, 3
      %s50 = scalar_select %p49, 0, %s48
      %s51 = sadd.s32 1, %s42
      %s52 = scalar_select %p49, %s51, %s42
      %p53 = scmp.ge.s32.totalorder %s52, 2
      %s54 = scalar_select %p53, 0, %s52
      %s55 = ssub.s32 %s43, %s50
      %p56 = scmp.eq.s32.totalorder %s55, 0
      %s58 = sadd.s32 %s57, 1
      %s59 = scalar_select %p56, %s57, %s58
      %p62 = pneg %p56
      %p63 = scmp.eq.s32.totalorder %s35, 5
      %p64 = por %p62, %p63
      %p65 = scmp.ne.s32.totalorder %s57, %s60
      %p66 = scmp.eq.s32.totalorder %s35, 0
      %p67 = por %p65, %p66
      %p68 = scmp.ne.s32.totalorder %s57, %s60
      %p69 = scmp.eq.s32.totalorder %s40, 5
      %p70 = por %p68, %p69
      %p71 = scmp.ne.s32.totalorder %s60, %s61
      %p72 = scmp.eq.s32.totalorder %s40, 0
      %p73 = por %p71, %p72
      %p74 = scmp.ne.s32.totalorder %s60, %s61
      %p75 = scmp.eq.s32.totalorder %s41, 5
      %p76 = por %p74, %p75
      %p78 = scmp.ne.s32.totalorder %s61, %s77
      %p79 = scmp.eq.s32.totalorder %s41, 0
      %p80 = por %p78, %p79
      %s81 = ssub.s32 %s43, %s50
      %p82 = scmp.eq.s32.totalorder %s81, 0
      %s84 = sadd.s32 %s83, 1
      %s85 = scalar_select %p82, %s83, %s84
      %p88 = pneg %p82
      %p89 = scmp.eq.s32.totalorder %s35, 5
      %p90 = por %p88, %p89
      %p91 = scmp.ne.s32.totalorder %s83, %s86
      %p92 = scmp.eq.s32.totalorder %s35, 0
      %p93 = por %p91, %p92
      %p94 = scmp.ne.s32.totalorder %s83, %s86
      %p95 = scmp.eq.s32.totalorder %s40, 5
      %p96 = por %p94, %p95
      %p97 = scmp.ne.s32.totalorder %s86, %s87
      %p98 = scmp.eq.s32.totalorder %s40, 0
      %p99 = por %p97, %p98
      %p100 = scmp.ne.s32.totalorder %s86, %s87
      %p101 = scmp.eq.s32.totalorder %s41, 5
      %p102 = por %p100, %p101
      %p104 = scmp.ne.s32.totalorder %s87, %s103
      %p105 = scmp.eq.s32.totalorder %s41, 0
      %p106 = por %p104, %p105
      %s107 = ssub.s32 %s43, %s50
      %p108 = scmp.eq.s32.totalorder %s107, 0
      %s110 = sadd.s32 %s109, 1
      %s111 = scalar_select %p108, %s109, %s110
      %p114 = pneg %p108
      %p115 = scmp.eq.s32.totalorder %s35, 5
      %p116 = por %p114, %p115
      %p117 = scmp.ne.s32.totalorder %s109, %s112
      %p118 = scmp.eq.s32.totalorder %s35, 0
      %p119 = por %p117, %p118
      %p120 = scmp.ne.s32.totalorder %s109, %s112
      %p121 = scmp.eq.s32.totalorder %s40, 5
      %p122 = por %p120, %p121
      %p123 = scmp.ne.s32.totalorder %s112, %s113
      %p124 = scmp.eq.s32.totalorder %s40, 0
      %p125 = por %p123, %p124
      %p126 = scmp.ne.s32.totalorder %s112, %s113
      %p127 = scmp.eq.s32.totalorder %s41, 5
      %p128 = por %p126, %p127
      %p130 = scmp.ne.s32.totalorder %s113, %s129
      %p131 = scmp.eq.s32.totalorder %s41, 0
      %p132 = por %p130, %p131
      %s133 = ssub.s32 %s42, %s54
      %p134 = scmp.eq.s32.totalorder %s133, 0
      %s136 = sadd.s32 %s135, 1
      %s137 = scalar_select %p134, %s135, %s136
      %p140 = pneg %p134
      %p141 = scmp.eq.s32.totalorder %s35, 5
      %p142 = por %p140, %p141
      %p143 = scmp.ne.s32.totalorder %s135, %s138
      %p144 = scmp.eq.s32.totalorder %s35, 0
      %p145 = por %p143, %p144
      %p146 = scmp.ne.s32.totalorder %s135, %s138
      %p147 = scmp.eq.s32.totalorder %s40, 5
      %p148 = por %p146, %p147
      %p149 = scmp.ne.s32.totalorder %s138, %s139
      %p150 = scmp.eq.s32.totalorder %s40, 0
      %p151 = por %p149, %p150
      %p152 = scmp.ne.s32.totalorder %s138, %s139
      %p153 = scmp.eq.s32.totalorder %s41, 5
      %p154 = por %p152, %p153
      %p156 = scmp.ne.s32.totalorder %s139, %s155
      %p157 = scmp.eq.s32.totalorder %s41, 0
      %p158 = por %p156, %p157
      %s159 = ssub.s32 %s42, %s54
      %p160 = scmp.eq.s32.totalorder %s159, 0
      %s162 = sadd.s32 %s161, 1
      %s163 = scalar_select %p160, %s161, %s162
      %p166 = pneg %p160
      %p167 = scmp.eq.s32.totalorder %s35, 5
      %p168 = por %p166, %p167
      %p169 = scmp.ne.s32.totalorder %s161, %s164
      %p170 = scmp.eq.s32.totalorder %s35, 0
      %p171 = por %p169, %p170
      %p172 = scmp.ne.s32.totalorder %s161, %s164
      %p173 = scmp.eq.s32.totalorder %s40, 5
      %p174 = por %p172, %p173
      %p175 = scmp.ne.s32.totalorder %s164, %s165
      %p176 = scmp.eq.s32.totalorder %s40, 0
      %p177 = por %p175, %p176
      %p178 = scmp.ne.s32.totalorder %s164, %s165
      %p179 = scmp.eq.s32.totalorder %s41, 5
      %p180 = por %p178, %p179
      %p182 = scmp.ne.s32.totalorder %s165, %s181
      %p183 = scmp.eq.s32.totalorder %s41, 0
      %p184 = por %p182, %p183
      %s185 = ssub.s32 %s42, %s54
      %p186 = scmp.eq.s32.totalorder %s185, 0
      %s188 = sadd.s32 %s187, 1
      %s189 = scalar_select %p186, %s187, %s188
      %p192 = pneg %p186
      %p193 = scmp.eq.s32.totalorder %s35, 5
      %p194 = por %p192, %p193
      %p195 = scmp.ne.s32.totalorder %s187, %s190
      %p196 = scmp.eq.s32.totalorder %s35, 0
      %p197 = por %p195, %p196
      %p198 = scmp.ne.s32.totalorder %s187, %s190
      %p199 = scmp.eq.s32.totalorder %s40, 5
      %p200 = por %p198, %p199
      %p201 = scmp.ne.s32.totalorder %s190, %s191
      %p202 = scmp.eq.s32.totalorder %s40, 0
      %p203 = por %p201, %p202
      %p204 = scmp.ne.s32.totalorder %s190, %s191
      %p205 = scmp.eq.s32.totalorder %s41, 5
      %p206 = por %p204, %p205
      %p208 = scmp.ne.s32.totalorder %s191, %s207
      %p209 = scmp.eq.s32.totalorder %s41, 0
      %p210 = por %p208, %p209
      %s211 = ssub.s32 %s42, %s54
      %p212 = scmp.eq.s32.totalorder %s211, 0
      %s214 = sadd.s32 %s213, 1
      %s215 = scalar_select %p212, %s213, %s214
      %p218 = pneg %p212
      %p219 = scmp.eq.s32.totalorder %s35, 5
      %p220 = por %p218, %p219
      %p221 = scmp.ne.s32.totalorder %s213, %s216
      %p222 = scmp.eq.s32.totalorder %s35, 0
      %p223 = por %p221, %p222
      %p224 = scmp.ne.s32.totalorder %s213, %s216
      %p225 = scmp.eq.s32.totalorder %s40, 5
      %p226 = por %p224, %p225
      %p227 = scmp.ne.s32.totalorder %s216, %s217
      %p228 = scmp.eq.s32.totalorder %s40, 0
      %p229 = por %p227, %p228
      %p230 = scmp.ne.s32.totalorder %s216, %s217
      %p231 = scmp.eq.s32.totalorder %s41, 5
      %p232 = por %p230, %p231
      %p234 = scmp.ne.s32.totalorder %s217, %s233
      %p235 = scmp.eq.s32.totalorder %s41, 0
      %p236 = por %p234, %p235
      %s238 = sadd.s32 %s237, 1
      %p241 = scmp.eq.s32.totalorder %s35, 5
      %p242 = scmp.ne.s32.totalorder %s237, %s239
      %p243 = scmp.eq.s32.totalorder %s35, 0
      %p244 = por %p242, %p243
      %p245 = scmp.ne.s32.totalorder %s237, %s239
      %p246 = scmp.eq.s32.totalorder %s40, 5
      %p247 = por %p245, %p246
      %p248 = scmp.ne.s32.totalorder %s239, %s240
      %p249 = scmp.eq.s32.totalorder %s40, 0
      %p250 = por %p248, %p249
      %p251 = scmp.ne.s32.totalorder %s239, %s240
      %p252 = scmp.eq.s32.totalorder %s41, 5
      %p253 = por %p251, %p252
      %p255 = scmp.ne.s32.totalorder %s240, %s254
      %p256 = scmp.eq.s32.totalorder %s41, 0
      %p257 = por %p255, %p256
      %s259 = sadd.s32 %s258, 1
      %p262 = scmp.eq.s32.totalorder %s35, 5
      %p263 = scmp.ne.s32.totalorder %s258, %s260
      %p264 = scmp.eq.s32.totalorder %s35, 0
      %p265 = por %p263, %p264
      %p266 = scmp.ne.s32.totalorder %s258, %s260
      %p267 = scmp.eq.s32.totalorder %s40, 5
      %p268 = por %p266, %p267
      %p269 = scmp.ne.s32.totalorder %s260, %s261
      %p270 = scmp.eq.s32.totalorder %s40, 0
      %p271 = por %p269, %p270
      %p272 = scmp.ne.s32.totalorder %s260, %s261
      %p273 = scmp.eq.s32.totalorder %s41, 5
      %p274 = por %p272, %p273
      %p276 = scmp.ne.s32.totalorder %s261, %s275
      %p277 = scmp.eq.s32.totalorder %s41, 0
      %p278 = por %p276, %p277
      %s280 = sadd.s32 %s279, 1
      %p283 = scmp.eq.s32.totalorder %s35, 5
      %p284 = scmp.ne.s32.totalorder %s279, %s281
      %p285 = scmp.eq.s32.totalorder %s35, 0
      %p286 = por %p284, %p285
      %p287 = scmp.ne.s32.totalorder %s279, %s281
      %p288 = scmp.eq.s32.totalorder %s40, 5
      %p289 = por %p287, %p288
      %p290 = scmp.ne.s32.totalorder %s281, %s282
      %p291 = scmp.eq.s32.totalorder %s40, 0
      %p292 = por %p290, %p291
      %p293 = scmp.ne.s32.totalorder %s281, %s282
      %p294 = scmp.eq.s32.totalorder %s41, 5
      %p295 = por %p293, %p294
      %p297 = scmp.ne.s32.totalorder %s282, %s296
      %p298 = scmp.eq.s32.totalorder %s41, 0
      %p299 = por %p297, %p298
      %s301 = sadd.s32 %s300, 1
      %p304 = scmp.eq.s32.totalorder %s35, 5
      %p305 = scmp.ne.s32.totalorder %s300, %s302
      %p306 = scmp.eq.s32.totalorder %s35, 0
      %p307 = por %p305, %p306
      %p308 = scmp.ne.s32.totalorder %s300, %s302
      %p309 = scmp.eq.s32.totalorder %s40, 5
      %p310 = por %p308, %p309
      %p311 = scmp.ne.s32.totalorder %s302, %s303
      %p312 = scmp.eq.s32.totalorder %s40, 0
      %p313 = por %p311, %p312
      %p314 = scmp.ne.s32.totalorder %s302, %s303
      %p315 = scmp.eq.s32.totalorder %s41, 5
      %p316 = por %p314, %p315
      %p318 = scmp.ne.s32.totalorder %s303, %s317
      %p319 = scmp.eq.s32.totalorder %s41, 0
      %p320 = por %p318, %p319
      %s322 = sadd.s32 %s321, 1
      %p325 = scmp.eq.s32.totalorder %s35, 5
      %p326 = scmp.ne.s32.totalorder %s321, %s323
      %p327 = scmp.eq.s32.totalorder %s35, 0
      %p328 = por %p326, %p327
      %p329 = scmp.ne.s32.totalorder %s321, %s323
      %p330 = scmp.eq.s32.totalorder %s40, 5
      %p331 = por %p329, %p330
      %p332 = scmp.ne.s32.totalorder %s323, %s324
      %p333 = scmp.eq.s32.totalorder %s40, 0
      %p334 = por %p332, %p333
      %p335 = scmp.ne.s32.totalorder %s323, %s324
      %p336 = scmp.eq.s32.totalorder %s41, 5
      %p337 = por %p335, %p336
      %p339 = scmp.ne.s32.totalorder %s324, %s338
      %p340 = scmp.eq.s32.totalorder %s41, 0
      %p341 = por %p339, %p340
      %s343 = sadd.s32 %s342, 1
      %p346 = scmp.eq.s32.totalorder %s35, 5
      %p347 = scmp.ne.s32.totalorder %s342, %s344
      %p348 = scmp.eq.s32.totalorder %s35, 0
      %p349 = por %p347, %p348
      %p350 = scmp.ne.s32.totalorder %s342, %s344
      %p351 = scmp.eq.s32.totalorder %s40, 5
      %p352 = por %p350, %p351
      %p353 = scmp.ne.s32.totalorder %s344, %s345
      %p354 = scmp.eq.s32.totalorder %s40, 0
      %p355 = por %p353, %p354
      %p356 = scmp.ne.s32.totalorder %s344, %s345
      %p357 = scmp.eq.s32.totalorder %s41, 5
      %p358 = por %p356, %p357
      %p360 = scmp.ne.s32.totalorder %s345, %s359
      %p361 = scmp.eq.s32.totalorder %s41, 0
      %p362 = por %p360, %p361
      %p363 = scmp.le.s32.totalorder 1, %s35
      %p364 = scmp.lt.s32.totalorder %s35, 7
      %p365 = pnand %p363, %p364
      %p366 = pneg %p365
      // Predicated region
      $region9: #{tpu_custom_call.1} parent=5 // pred_check
        _
      $region10: #{tpu_custom_call.1} parent=5 // pred_check_branch
        %368 = sbr.rel (%p365) target = $region12
      $region11: #{tpu_custom_call.1} parent=5 // pred_region
        %s369 = ssub.s32 %s35, 1
        // Predicated region
        $region13: #{tpu_custom_call.1} parent=11 // pred_check
          %p370 = pneg %p250
        $region14: #{tpu_custom_call.1} parent=11 // pred_check_branch
          %372 = sbr.rel (%p370) target = $region16
        $region15: #{tpu_custom_call.1} parent=11 // pred_region
          %s374 = ssub.s32 128, 128
          %375 = vsyncadd [#allocation19], %s374
          %s376 = sshll.u32 [#allocation18], 4
          %s377 = int_to_ptr.vmem [resolvable:$true] %s376
          %382 = dma.hbm_to_vmem [thread:$0]  %s8, 128, %s377, [#allocation19], 64, 64, 4
        $region16: #{tpu_custom_call.1} parent=11 // pred_fallthru
          _
        // Predicated region
        $region17: #{tpu_custom_call.1} parent=11 // pred_check
          %p383 = pneg %p271
        $region18: #{tpu_custom_call.1} parent=11 // pred_check_branch
          %385 = sbr.rel (%p383) target = $region20
        $region19: #{tpu_custom_call.1} parent=11 // pred_region
          %s387 = ssub.s32 2048, 2048
          %388 = vsyncadd [#allocation19], %s387
          %s389 = sshll.u32 [#allocation20], 4
          %s390 = int_to_ptr.vmem [resolvable:$true] %s389
          %395 = dma.hbm_to_vmem [thread:$0]  %s9, 2048, %s390, [#allocation19], 128, 128, 8
        $region20: #{tpu_custom_call.1} parent=11 // pred_fallthru
          _
        // Predicated region
        $region21: #{tpu_custom_call.1} parent=11 // pred_check
          %p396 = pneg %p292
        $region22: #{tpu_custom_call.1} parent=11 // pred_check_branch
          %398 = sbr.rel (%p396) target = $region24
        $region23: #{tpu_custom_call.1} parent=11 // pred_region
          %s400 = ssub.s32 16, 16
          %401 = vsyncadd [#allocation22], %s400
          %s403 = sshll.u32 [#allocation21], 4
          %s404 = int_to_ptr.vmem [resolvable:$true] %s403
          %406 = dma.hbm_to_vmem [thread:$0]  %s10, 16, %s404, [#allocation22]
        $region24: #{tpu_custom_call.1} parent=11 // pred_fallthru
          _
        // Predicated region
        $region25: #{tpu_custom_call.1} parent=11 // pred_check
          %p407 = pneg %p313
        $region26: #{tpu_custom_call.1} parent=11 // pred_check_branch
          %409 = sbr.rel (%p407) target = $region28
        $region27: #{tpu_custom_call.1} parent=11 // pred_region
          %s411 = ssub.s32 2048, 2048
          %412 = vsyncadd [#allocation22], %s411
          %s413 = sshll.u32 [#allocation23], 4
          %s414 = int_to_ptr.vmem [resolvable:$true] %s413
          %419 = dma.hbm_to_vmem [thread:$0]  %s11, 2048, %s414, [#allocation22], 128, 128, 8
        $region28: #{tpu_custom_call.1} parent=11 // pred_fallthru
          _
        // Predicated region
        $region29: #{tpu_custom_call.1} parent=11 // pred_check
          %p420 = pneg %p334
        $region30: #{tpu_custom_call.1} parent=11 // pred_check_branch
          %422 = sbr.rel (%p420) target = $region32
        $region31: #{tpu_custom_call.1} parent=11 // pred_region
          %s424 = ssub.s32 16, 16
          %425 = vsyncadd [#allocation25], %s424
          %s427 = sshll.u32 [#allocation24], 4
          %s428 = int_to_ptr.vmem [resolvable:$true] %s427
          %430 = dma.hbm_to_vmem [thread:$0]  %s12, 16, %s428, [#allocation25]
        $region32: #{tpu_custom_call.1} parent=11 // pred_fallthru
          _
      $region12: #{tpu_custom_call.1} parent=5 // pred_fallthru
        _
      %p431 = scmp.lt.s32.totalorder %s35, 6
      // Predicated region
      $region33: #{tpu_custom_call.1} parent=5 // pred_check
        %p432 = pneg %p431
      $region34: #{tpu_custom_call.1} parent=5 // pred_check_branch
        %434 = sbr.rel (%p432) target = $region36
      $region35: #{tpu_custom_call.1} parent=5 // pred_region
        // Predicated region
        $region37: #{tpu_custom_call.1} parent=35 // pred_check
          %p435 = pneg %p67
        $region38: #{tpu_custom_call.1} parent=35 // pred_check_branch
          %437 = sbr.rel (%p435) target = $region40
        $region39: #{tpu_custom_call.1} parent=35 // pred_region
          %s438 = sand.u32 %s57, 1
          %s439 = scalar_lea.sflag [#allocation7], %s438
          %s440 = sand.u32 %s57, 1
          %s441 = smul.addr %s440, 64
          %s442 = scalar_lea.vmem [#allocation6], %s441
          %s443 = smul.u32 16, %s43
          %s445 = ssub.s32 1024, 1024
          %446 = vsyncadd %s439, %s445
          %s447 = smul.addr %s443, 64
          %s448 = scalar_lea.hbm %s1, %s447
          %s449 = sshll.u32 %s442, 4
          %s450 = int_to_ptr.vmem [resolvable:$true] %s449
          %455 = dma.hbm_to_vmem [thread:$0]  %s448, 1024, %s450, %s439, 64, 64, 4
        $region40: #{tpu_custom_call.1} parent=35 // pred_fallthru
          _
        // Predicated region
        $region41: #{tpu_custom_call.1} parent=35 // pred_check
          %p456 = pneg %p93
        $region42: #{tpu_custom_call.1} parent=35 // pred_check_branch
          %458 = sbr.rel (%p456) target = $region44
        $region43: #{tpu_custom_call.1} parent=35 // pred_region
          %s459 = sand.u32 %s35, 1
          %s460 = scalar_lea.sflag [#allocation10], %s459
          %s461 = sand.u32 %s83, 1
          %s462 = smul.addr %s461, 64
          %s463 = scalar_lea.vmem [#allocation9], %s462
          %s465 = ssub.s32 1024, 1024
          %466 = vsyncadd %s460, %s465
          %s467 = smul.addr %s43, 64
          %s468 = scalar_lea.hbm %s2, %s467
          %s469 = sshll.u32 %s463, 4
          %s470 = int_to_ptr.vmem [resolvable:$true] %s469
          %475 = dma.hbm_to_vmem [thread:$0]  %s468, 1024, %s470, %s460, 192, 64, 4
        $region44: #{tpu_custom_call.1} parent=35 // pred_fallthru
          _
        // Predicated region
        $region45: #{tpu_custom_call.1} parent=35 // pred_check
          %p476 = pneg %p119
        $region46: #{tpu_custom_call.1} parent=35 // pred_check_branch
          %478 = sbr.rel (%p476) target = $region48
        $region47: #{tpu_custom_call.1} parent=35 // pred_region
          %s479 = sand.u32 %s35, 1
          %s480 = scalar_lea.sflag [#allocation10], %s479
          %s481 = sand.u32 %s109, 1
          %s482 = smul.addr %s481, 128
          %s483 = scalar_lea.vmem [#allocation11], %s482
          %s484 = smul.u32 16, %s43
          %s486 = ssub.s32 2048, 2048
          %487 = vsyncadd %s480, %s486
          %s488 = smul.addr %s484, 128
          %s489 = scalar_lea.hbm %s3, %s488
          %s490 = sshll.u32 %s483, 4
          %s491 = int_to_ptr.vmem [resolvable:$true] %s490
          %496 = dma.hbm_to_vmem [thread:$0]  %s489, 2048, %s491, %s480, 128, 128, 8
        $region48: #{tpu_custom_call.1} parent=35 // pred_fallthru
          _
        // Predicated region
        $region49: #{tpu_custom_call.1} parent=35 // pred_check
          %p497 = pneg %p145
        $region50: #{tpu_custom_call.1} parent=35 // pred_check_branch
          %499 = sbr.rel (%p497) target = $region52
        $region51: #{tpu_custom_call.1} parent=35 // pred_region
          %s500 = sand.u32 %s35, 1
          %s501 = scalar_lea.sflag [#allocation13], %s500
          %s502 = sand.u32 %s135, 1
          %s503 = smul.addr %s502, 128
          %s504 = scalar_lea.vmem [#allocation12], %s503
          %s506 = ssub.s32 2048, 2048
          %507 = vsyncadd %s501, %s506
          %s508 = smul.addr %s42, 16
          %s509 = smul.addr %s508, 128
          %s510 = scalar_lea.hbm %s4, %s509
          %s511 = sshll.u32 %s504, 4
          %s512 = int_to_ptr.vmem [resolvable:$true] %s511
          %517 = dma.hbm_to_vmem [thread:$0]  %s510, 2048, %s512, %s501, 128, 128, 8
        $region52: #{tpu_custom_call.1} parent=35 // pred_fallthru
          _
        // Predicated region
        $region53: #{tpu_custom_call.1} parent=35 // pred_check
          %p518 = pneg %p171
        $region54: #{tpu_custom_call.1} parent=35 // pred_check_branch
          %520 = sbr.rel (%p518) target = $region56
        $region55: #{tpu_custom_call.1} parent=35 // pred_region
          %s521 = sand.u32 %s35, 1
          %s522 = scalar_lea.sflag [#allocation13], %s521
          %s523 = sand.u32 %s161, 1
          %s524 = smul.addr %s523, 128
          %s525 = scalar_lea.vmem [#allocation14], %s524
          %s527 = ssub.s32 2048, 2048
          %528 = vsyncadd %s522, %s527
          %s529 = smul.addr %s42, 16
          %s530 = smul.addr %s529, 128
          %s531 = scalar_lea.hbm %s5, %s530
          %s532 = sshll.u32 %s525, 4
          %s533 = int_to_ptr.vmem [resolvable:$true] %s532
          %538 = dma.hbm_to_vmem [thread:$0]  %s531, 2048, %s533, %s522, 128, 128, 8
        $region56: #{tpu_custom_call.1} parent=35 // pred_fallthru
          _
        // Predicated region
        $region57: #{tpu_custom_call.1} parent=35 // pred_check
          %p539 = pneg %p197
        $region58: #{tpu_custom_call.1} parent=35 // pred_check_branch
          %541 = sbr.rel (%p539) target = $region60
        $region59: #{tpu_custom_call.1} parent=35 // pred_region
          %s542 = sand.u32 %s35, 1
          %s543 = scalar_lea.sflag [#allocation16], %s542
          %s544 = sand.u32 %s187, 1
          %s545 = smul.addr %s544, 128
          %s546 = scalar_lea.vmem [#allocation15], %s545
          %s548 = ssub.s32 2048, 2048
          %549 = vsyncadd %s543, %s548
          %s550 = smul.addr %s42, 16
          %s551 = smul.addr %s550, 128
          %s552 = scalar_lea.hbm %s6, %s551
          %s553 = sshll.u32 %s546, 4
          %s554 = int_to_ptr.vmem [resolvable:$true] %s553
          %559 = dma.hbm_to_vmem [thread:$0]  %s552, 2048, %s554, %s543, 128, 128, 8
        $region60: #{tpu_custom_call.1} parent=35 // pred_fallthru
          _
        // Predicated region
        $region61: #{tpu_custom_call.1} parent=35 // pred_check
          %p560 = pneg %p223
        $region62: #{tpu_custom_call.1} parent=35 // pred_check_branch
          %562 = sbr.rel (%p560) target = $region64
        $region63: #{tpu_custom_call.1} parent=35 // pred_region
          %s563 = sand.u32 %s35, 1
          %s564 = scalar_lea.sflag [#allocation16], %s563
          %s565 = sand.u32 %s213, 1
          %s566 = smul.addr %s565, 8
          %s567 = scalar_lea.vmem [#allocation17], %s566
          %s569 = ssub.s32 128, 128
          %570 = vsyncadd %s564, %s569
          %s571 = smul.addr %s42, 128
          %s572 = scalar_lea.hbm %s7, %s571
          %s574 = sshll.u32 %s567, 4
          %s575 = int_to_ptr.vmem [resolvable:$true] %s574
          %577 = dma.hbm_to_vmem [thread:$0]  %s572, 128, %s575, %s564
        $region64: #{tpu_custom_call.1} parent=35 // pred_fallthru
          _
      $region36: #{tpu_custom_call.1} parent=5 // pred_fallthru
        _
      %p578 = scmp.le.s32.totalorder 1, %s35
      %p579 = scmp.lt.s32.totalorder %s35, 7
      %p580 = pnand %p578, %p579
      %p581 = pneg %p580
      // Predicated region
      $region65: #{tpu_custom_call.1} parent=5 // pred_check
        _
      $region66: #{tpu_custom_call.1} parent=5 // pred_check_branch
        %583 = sbr.rel (%p580) target = $region68
      $region67: #{tpu_custom_call.1} parent=5 // pred_region
        %s584 = ssub.s32 %s35, 1
        %s585 = sand.u32 %s60, 1
        %s586 = scalar_lea.sflag [#allocation7], %s585
        %s587 = sand.u32 %s60, 1
        %s588 = smul.addr %s587, 64
        %s589 = scalar_lea.vmem [#allocation6], %s588
        // Predicated region
        $region69: #{tpu_custom_call.1} parent=67 // pred_check
          %p590 = pneg %p73
        $region70: #{tpu_custom_call.1} parent=67 // pred_check_branch
          %592 = sbr.rel (%p590) target = $region72
        $region71: #{tpu_custom_call.1} parent=67 // pred_region
          %593 = dma.done %s586, 1024
        $region72: #{tpu_custom_call.1} parent=67 // pred_fallthru
          _
        %s594 = sand.u32 %s40, 1
        %s595 = scalar_lea.sflag [#allocation10], %s594
        %s596 = sand.u32 %s86, 1
        %s597 = smul.addr %s596, 64
        %s598 = scalar_lea.vmem [#allocation9], %s597
        // Predicated region
        $region73: #{tpu_custom_call.1} parent=67 // pred_check
          %p599 = pneg %p99
        $region74: #{tpu_custom_call.1} parent=67 // pred_check_branch
          %601 = sbr.rel (%p599) target = $region76
        $region75: #{tpu_custom_call.1} parent=67 // pred_region
          %602 = dma.done %s595, 1024
        $region76: #{tpu_custom_call.1} parent=67 // pred_fallthru
          _
        %s603 = sand.u32 %s40, 1
        %s604 = scalar_lea.sflag [#allocation10], %s603
        %s605 = sand.u32 %s112, 1
        %s606 = smul.addr %s605, 128
        %s607 = scalar_lea.vmem [#allocation11], %s606
        // Predicated region
        $region77: #{tpu_custom_call.1} parent=67 // pred_check
          %p608 = pneg %p125
        $region78: #{tpu_custom_call.1} parent=67 // pred_check_branch
          %610 = sbr.rel (%p608) target = $region80
        $region79: #{tpu_custom_call.1} parent=67 // pred_region
          %611 = dma.done %s604, 2048
        $region80: #{tpu_custom_call.1} parent=67 // pred_fallthru
          _
        %s612 = sand.u32 %s40, 1
        %s613 = scalar_lea.sflag [#allocation13], %s612
        %s614 = sand.u32 %s138, 1
        %s615 = smul.addr %s614, 128
        %s616 = scalar_lea.vmem [#allocation12], %s615
        // Predicated region
        $region81: #{tpu_custom_call.1} parent=67 // pred_check
          %p617 = pneg %p151
        $region82: #{tpu_custom_call.1} parent=67 // pred_check_branch
          %619 = sbr.rel (%p617) target = $region84
        $region83: #{tpu_custom_call.1} parent=67 // pred_region
          %620 = dma.done %s613, 2048
        $region84: #{tpu_custom_call.1} parent=67 // pred_fallthru
          _
        %s621 = sand.u32 %s40, 1
        %s622 = scalar_lea.sflag [#allocation13], %s621
        %s623 = sand.u32 %s164, 1
        %s624 = smul.addr %s623, 128
        %s625 = scalar_lea.vmem [#allocation14], %s624
        // Predicated region
        $region85: #{tpu_custom_call.1} parent=67 // pred_check
          %p626 = pneg %p177
        $region86: #{tpu_custom_call.1} parent=67 // pred_check_branch
          %628 = sbr.rel (%p626) target = $region88
        $region87: #{tpu_custom_call.1} parent=67 // pred_region
          %629 = dma.done %s622, 2048
        $region88: #{tpu_custom_call.1} parent=67 // pred_fallthru
          _
        %s630 = sand.u32 %s40, 1
        %s631 = scalar_lea.sflag [#allocation16], %s630
        %s632 = sand.u32 %s190, 1
        %s633 = smul.addr %s632, 128
        %s634 = scalar_lea.vmem [#allocation15], %s633
        // Predicated region
        $region89: #{tpu_custom_call.1} parent=67 // pred_check
          %p635 = pneg %p203
        $region90: #{tpu_custom_call.1} parent=67 // pred_check_branch
          %637 = sbr.rel (%p635) target = $region92
        $region91: #{tpu_custom_call.1} parent=67 // pred_region
          %638 = dma.done %s631, 2048
        $region92: #{tpu_custom_call.1} parent=67 // pred_fallthru
          _
        %s639 = sand.u32 %s40, 1
        %s640 = scalar_lea.sflag [#allocation16], %s639
        %s641 = sand.u32 %s216, 1
        %s642 = smul.addr %s641, 8
        %s643 = scalar_lea.vmem [#allocation17], %s642
        // Predicated region
        $region93: #{tpu_custom_call.1} parent=67 // pred_check
          %p644 = pneg %p229
        $region94: #{tpu_custom_call.1} parent=67 // pred_check_branch
          %646 = sbr.rel (%p644) target = $region96
        $region95: #{tpu_custom_call.1} parent=67 // pred_region
          %647 = dma.done %s640, 128
        $region96: #{tpu_custom_call.1} parent=67 // pred_fallthru
          _
        // Predicated region
        $region97: #{tpu_custom_call.1} parent=67 // pred_check
          %p648 = pneg %p250
        $region98: #{tpu_custom_call.1} parent=67 // pred_check_branch
          %650 = sbr.rel (%p648) target = $region100
        $region99: #{tpu_custom_call.1} parent=67 // pred_region
          %651 = dma.done [#allocation19], 128
        $region100: #{tpu_custom_call.1} parent=67 // pred_fallthru
          _
        // Predicated region
        $region101: #{tpu_custom_call.1} parent=67 // pred_check
          %p652 = pneg %p271
        $region102: #{tpu_custom_call.1} parent=67 // pred_check_branch
          %654 = sbr.rel (%p652) target = $region104
        $region103: #{tpu_custom_call.1} parent=67 // pred_region
          %655 = dma.done [#allocation19], 2048
        $region104: #{tpu_custom_call.1} parent=67 // pred_fallthru
          _
        // Predicated region
        $region105: #{tpu_custom_call.1} parent=67 // pred_check
          %p656 = pneg %p292
        $region106: #{tpu_custom_call.1} parent=67 // pred_check_branch
          %658 = sbr.rel (%p656) target = $region108
        $region107: #{tpu_custom_call.1} parent=67 // pred_region
          %659 = dma.done [#allocation22], 16
        $region108: #{tpu_custom_call.1} parent=67 // pred_fallthru
          _
        // Predicated region
        $region109: #{tpu_custom_call.1} parent=67 // pred_check
          %p660 = pneg %p313
        $region110: #{tpu_custom_call.1} parent=67 // pred_check_branch
          %662 = sbr.rel (%p660) target = $region112
        $region111: #{tpu_custom_call.1} parent=67 // pred_region
          %663 = dma.done [#allocation22], 2048
        $region112: #{tpu_custom_call.1} parent=67 // pred_fallthru
          _
        // Predicated region
        $region113: #{tpu_custom_call.1} parent=67 // pred_check
          %p664 = pneg %p334
        $region114: #{tpu_custom_call.1} parent=67 // pred_check_branch
          %666 = sbr.rel (%p664) target = $region116
        $region115: #{tpu_custom_call.1} parent=67 // pred_region
          %667 = dma.done [#allocation25], 16
        $region116: #{tpu_custom_call.1} parent=67 // pred_fallthru
          _
        %s668 = sand.u32 %s60, 1
        %s669 = scalar_lea.sflag [#allocation7], %s668
        %s670 = sand.u32 %s60, 1
        %s671 = smul.addr %s670, 64
        %s672 = scalar_lea.vmem [#allocation6], %s671
        %p673 = pneg %p73
        %p674 = pneg %p70
        %s675 = sand.u32 %s40, 1
        %s676 = scalar_lea.sflag [#allocation10], %s675
        %s677 = sand.u32 %s86, 1
        %s678 = smul.addr %s677, 64
        %s679 = scalar_lea.vmem [#allocation9], %s678
        %p680 = pneg %p99
        %p681 = pneg %p96
        %s682 = sand.u32 %s40, 1
        %s683 = scalar_lea.sflag [#allocation10], %s682
        %s684 = sand.u32 %s112, 1
        %s685 = smul.addr %s684, 128
        %s686 = scalar_lea.vmem [#allocation11], %s685
        %p687 = pneg %p125
        %p688 = pneg %p122
        %s689 = sand.u32 %s40, 1
        %s690 = scalar_lea.sflag [#allocation13], %s689
        %s691 = sand.u32 %s138, 1
        %s692 = smul.addr %s691, 128
        %s693 = scalar_lea.vmem [#allocation12], %s692
        %p694 = pneg %p151
        %p695 = pneg %p148
        %s696 = sand.u32 %s40, 1
        %s697 = scalar_lea.sflag [#allocation13], %s696
        %s698 = sand.u32 %s164, 1
        %s699 = smul.addr %s698, 128
        %s700 = scalar_lea.vmem [#allocation14], %s699
        %p701 = pneg %p177
        %p702 = pneg %p174
        %s703 = sand.u32 %s40, 1
        %s704 = scalar_lea.sflag [#allocation16], %s703
        %s705 = sand.u32 %s190, 1
        %s706 = smul.addr %s705, 128
        %s707 = scalar_lea.vmem [#allocation15], %s706
        %p708 = pneg %p203
        %p709 = pneg %p200
        %s710 = sand.u32 %s40, 1
        %s711 = scalar_lea.sflag [#allocation16], %s710
        %s712 = sand.u32 %s216, 1
        %s713 = smul.addr %s712, 8
        %s714 = scalar_lea.vmem [#allocation17], %s713
        %p715 = pneg %p229
        %p716 = pneg %p226
        %p717 = pneg %p250
        %p718 = pneg %p247
        %p719 = pneg %p271
        %p720 = pneg %p268
        %p721 = pneg %p292
        %p722 = pneg %p289
        %p723 = pneg %p313
        %p724 = pneg %p310
        %p725 = pneg %p334
        %p726 = pneg %p331
        %p727 = pneg %p355
        %p728 = pneg %p352
        %s729 = smul.u32 16, %s45
        %s730 = smul.u32 16, %s45
        %p732 = scmp.eq.s32.totalorder %s44, 0
        %p733 = scmp.eq.s32.totalorder %s45, 0
        %p734 = pnand %p732, %p733
        %p735 = pneg %p734
        // Predicated region
        $region117: #{tpu_custom_call.1} parent=67 // pred_check
          _
        $region118: #{tpu_custom_call.1} parent=67 // pred_check_branch
          %737 = sbr.rel (%p734) target = $region120
        $region119: #{tpu_custom_call.1} parent=67 // pred_region
          // Predicated region
          $region121: #{tpu_custom_call.1} parent=119 // pred_check
            _
          $region122: #{tpu_custom_call.1} parent=119 // pred_check_branch
            %739 = sbr.rel target = $region124
          $region123: #{tpu_custom_call.1} parent=119 // pred_region
            %740 = sst [smem:[#allocation29]] [#allocation28]
            %741 = sst [smem:[#allocation30]] [#allocation27]
          $region124: #{tpu_custom_call.1} parent=119 // pred_fallthru
            _
          %743 = shalt.err (0)
          %s745 = sshll.u32 [#allocation2], 4
          %s746 = int_to_ptr.vmem [resolvable:$true] %s745
          %748 = dma.hbm_to_vmem [thread:$0]  %s0, 2048, %s746, [#allocation5]
          %s749 = smul.u32 128, 1
          %s750 = sshll.u32 %s749, 4
          %751 = dma.done [#allocation5], %s750
          %v752 = vld [vmem:[#allocation2] sm:$0xff]
          %v753 = vld [vmem:[#allocation2 + $0x8] sm:$0xff]
          %v754 = vld [vmem:[#allocation2 + $0x10] sm:$0xff]
          %v755 = vld [vmem:[#allocation2 + $0x18] sm:$0xff]
          %v756 = vld [vmem:[#allocation2 + $0x20] sm:$0xff]
          %v757 = vld [vmem:[#allocation2 + $0x28] sm:$0xff]
          %v758 = vld [vmem:[#allocation2 + $0x30] sm:$0xff]
          %v759 = vld [vmem:[#allocation2 + $0x38] sm:$0xff]
          %v760 = vld [vmem:[#allocation2 + $0x40] sm:$0xff]
          %v761 = vld [vmem:[#allocation2 + $0x48] sm:$0xff]
          %v762 = vld [vmem:[#allocation2 + $0x50] sm:$0xff]
          %v763 = vld [vmem:[#allocation2 + $0x58] sm:$0xff]
          %v764 = vld [vmem:[#allocation2 + $0x60] sm:$0xff]
          %v765 = vld [vmem:[#allocation2 + $0x68] sm:$0xff]
          %v766 = vld [vmem:[#allocation2 + $0x70] sm:$0xff]
          %v767 = vld [vmem:[#allocation2 + $0x78] sm:$0xff]
          %v768 = vpack.c.bf16 %v753, %v752
          %v769 = vpack.c.bf16 %v755, %v754
          %v770 = vpack.c.bf16 %v757, %v756
          %v771 = vpack.c.bf16 %v759, %v758
          %v772 = vpack.c.bf16 %v761, %v760
          %v773 = vpack.c.bf16 %v763, %v762
          %v774 = vpack.c.bf16 %v765, %v764
          %v775 = vpack.c.bf16 %v767, %v766
          %776 = vst [vmem:[#allocation3] sm:$0xff] %v768
          %777 = vst [vmem:[#allocation3 + $0x8] sm:$0xff] %v769
          %778 = vst [vmem:[#allocation3 + $0x10] sm:$0xff] %v770
          %779 = vst [vmem:[#allocation3 + $0x18] sm:$0xff] %v771
          %780 = vst [vmem:[#allocation3 + $0x20] sm:$0xff] %v772
          %781 = vst [vmem:[#allocation3 + $0x28] sm:$0xff] %v773
          %782 = vst [vmem:[#allocation3 + $0x30] sm:$0xff] %v774
          %783 = vst [vmem:[#allocation3 + $0x38] sm:$0xff] %v775
        $region120: #{tpu_custom_call.1} parent=67 // pred_fallthru
          _
        // Predicated region
        $region125: #{tpu_custom_call.1} parent=67 // pred_check
          %p784 = pneg %p733
        $region126: #{tpu_custom_call.1} parent=67 // pred_check_branch
          %786 = sbr.rel (%p784) target = $region128
        $region127: #{tpu_custom_call.1} parent=67 // pred_region
          %787 = vst [vmem:[#allocation4] sm:$0xff] 0.0
          %788 = vst [vmem:[#allocation4 + $0x8] sm:$0xff] 0.0
          %789 = vst [vmem:[#allocation4 + $0x10] sm:$0xff] 0.0
          %790 = vst [vmem:[#allocation4 + $0x18] sm:$0xff] 0.0
          %791 = vst [vmem:[#allocation4 + $0x20] sm:$0xff] 0.0
          %792 = vst [vmem:[#allocation4 + $0x28] sm:$0xff] 0.0
          %793 = vst [vmem:[#allocation4 + $0x30] sm:$0xff] 0.0
          %794 = vst [vmem:[#allocation4 + $0x38] sm:$0xff] 0.0
          %795 = vst [vmem:[#allocation4 + $0x40] sm:$0xff] 0.0
          %796 = vst [vmem:[#allocation4 + $0x48] sm:$0xff] 0.0
          %797 = vst [vmem:[#allocation4 + $0x50] sm:$0xff] 0.0
          %798 = vst [vmem:[#allocation4 + $0x58] sm:$0xff] 0.0
          %799 = vst [vmem:[#allocation4 + $0x60] sm:$0xff] 0.0
          %800 = vst [vmem:[#allocation4 + $0x68] sm:$0xff] 0.0
          %801 = vst [vmem:[#allocation4 + $0x70] sm:$0xff] 0.0
          %802 = vst [vmem:[#allocation4 + $0x78] sm:$0xff] 0.0
        $region128: #{tpu_custom_call.1} parent=67 // pred_fallthru
          _
        %v803 = vld [vmem:[%s643] sm:$0xff]
        %v804 = vld [vmem:[%s589] sm:$0xf]
        %v805 = vld [vmem:[%s589 + $0x4] sm:$0xf]
        %v806 = vld [vmem:[%s589 + $0x8] sm:$0xf]
        %v807 = vld [vmem:[%s589 + $0xc] sm:$0xf]
        %v808 = vld [vmem:[%s589 + $0x10] sm:$0xf]
        %v809 = vld [vmem:[%s589 + $0x14] sm:$0xf]
        %v810 = vld [vmem:[%s589 + $0x18] sm:$0xf]
        %v811 = vld [vmem:[%s589 + $0x1c] sm:$0xf]
        %v812 = vld [vmem:[%s589 + $0x20] sm:$0xf]
        %v813 = vld [vmem:[%s589 + $0x24] sm:$0xf]
        %v814 = vld [vmem:[%s589 + $0x28] sm:$0xf]
        %v815 = vld [vmem:[%s589 + $0x2c] sm:$0xf]
        %v816 = vld [vmem:[%s589 + $0x30] sm:$0xf]
        %v817 = vld [vmem:[%s589 + $0x34] sm:$0xf]
        %v818 = vld [vmem:[%s589 + $0x38] sm:$0xf]
        %v819 = vld [vmem:[%s589 + $0x3c] sm:$0xf]
        %v820 = vld [vmem:[#allocation3] sm:$0xff]
        %v821 = vld [vmem:[#allocation3 + $0x8] sm:$0xff]
        %v822 = vld [vmem:[#allocation3 + $0x10] sm:$0xff]
        %v823 = vld [vmem:[#allocation3 + $0x18] sm:$0xff]
        %v824 = vld [vmem:[#allocation3 + $0x20] sm:$0xff]
        %v825 = vld [vmem:[#allocation3 + $0x28] sm:$0xff]
        %v826 = vld [vmem:[#allocation3 + $0x30] sm:$0xff]
        %v827 = vld [vmem:[#allocation3 + $0x38] sm:$0xff]
        %v828 = vld [vmem:[%s607] sm:$0xff]
        %v829 = vld [vmem:[%s607 + $0x8] sm:$0xff]
        %v830 = vld [vmem:[%s607 + $0x10] sm:$0xff]
        %v831 = vld [vmem:[%s607 + $0x18] sm:$0xff]
        %v832 = vld [vmem:[%s607 + $0x20] sm:$0xff]
        %v833 = vld [vmem:[%s607 + $0x28] sm:$0xff]
        %v834 = vld [vmem:[%s607 + $0x30] sm:$0xff]
        %v835 = vld [vmem:[%s607 + $0x38] sm:$0xff]
        %v836 = vld [vmem:[%s607 + $0x40] sm:$0xff]
        %v837 = vld [vmem:[%s607 + $0x48] sm:$0xff]
        %v838 = vld [vmem:[%s607 + $0x50] sm:$0xff]
        %v839 = vld [vmem:[%s607 + $0x58] sm:$0xff]
        %v840 = vld [vmem:[%s607 + $0x60] sm:$0xff]
        %v841 = vld [vmem:[%s607 + $0x68] sm:$0xff]
        %v842 = vld [vmem:[%s607 + $0x70] sm:$0xff]
        %v843 = vld [vmem:[%s607 + $0x78] sm:$0xff]
        %v844 = vld [vmem:[%s616] sm:$0xff]
        %v845 = vld [vmem:[%s616 + $0x8] sm:$0xff]
        %v846 = vld [vmem:[%s616 + $0x10] sm:$0xff]
        %v847 = vld [vmem:[%s616 + $0x18] sm:$0xff]
        %v848 = vld [vmem:[%s616 + $0x20] sm:$0xff]
        %v849 = vld [vmem:[%s616 + $0x28] sm:$0xff]
        %v850 = vld [vmem:[%s616 + $0x30] sm:$0xff]
        %v851 = vld [vmem:[%s616 + $0x38] sm:$0xff]
        %v852 = vld [vmem:[%s616 + $0x40] sm:$0xff]
        %v853 = vld [vmem:[%s616 + $0x48] sm:$0xff]
        %v854 = vld [vmem:[%s616 + $0x50] sm:$0xff]
        %v855 = vld [vmem:[%s616 + $0x58] sm:$0xff]
        %v856 = vld [vmem:[%s616 + $0x60] sm:$0xff]
        %v857 = vld [vmem:[%s616 + $0x68] sm:$0xff]
        %v858 = vld [vmem:[%s616 + $0x70] sm:$0xff]
        %v859 = vld [vmem:[%s616 + $0x78] sm:$0xff]
        %v860 = vlaneseq
        %v861 = vshrl.u32 %v860, 7
        %v862 = vsub.s32 0, %v861
        %v863 = vrot.slane %v803, %v862
        %864 = vmatprep.subr.mxu0 0.0
        %865 = vmatpush1.msra.mxu0 %v844
        %866 = vmatprep.subr.mxu0 0.0
        %867 = vmatpush1.msra.mxu0 %v845
        %868 = vmatprep.subr.mxu0 0.0
        %869 = vmatpush1.msra.mxu0 %v846
        %870 = vmatprep.subr.mxu0 0.0
        %871 = vmatpush1.msra.mxu0 %v847
        %872 = vmatprep.subr.mxu0 0.0
        %873 = vmatpush1.msra.mxu0 %v848
        %874 = vmatprep.subr.mxu0 0.0
        %875 = vmatpush1.msra.mxu0 %v849
        %876 = vmatprep.subr.mxu0 0.0
        %877 = vmatpush1.msra.mxu0 %v850
        %878 = vmatprep.subr.mxu0 0.0
        %879 = vmatpush1.msra.mxu0 %v851
        %880 = vmatprep.subr.mxu0 0.0
        %881 = vmatpush1.msra.mxu0 %v852
        %882 = vmatprep.subr.mxu0 0.0
        %883 = vmatpush1.msra.mxu0 %v853
        %884 = vmatprep.subr.mxu0 0.0
        %885 = vmatpush1.msra.mxu0 %v854
        %886 = vmatprep.subr.mxu0 0.0
        %887 = vmatpush1.msra.mxu0 %v855
        %888 = vmatprep.subr.mxu0 0.0
        %889 = vmatpush1.msra.mxu0 %v856
        %890 = vmatprep.subr.mxu0 0.0
        %891 = vmatpush1.msra.mxu0 %v857
        %892 = vmatprep.subr.mxu0 0.0
        %893 = vmatpush1.msra.mxu0 %v858
        %894 = vmatprep.subr.mxu0 0.0
        %895 = vmatpush1.msra.mxu0 %v859
        %896 = vmatprep.subr.mxu0 0.0
        %897 = vmatpush1.msra.mxu0 0.0
        %898 = vmatprep.subr.mxu0 0.0
        %899 = vmatpush1.msra.mxu0 0.0
        %900 = vmatprep.subr.mxu0 0.0
        %901 = vmatpush1.msra.mxu0 0.0
        %902 = vmatprep.subr.mxu0 0.0
        %903 = vmatpush1.msra.mxu0 0.0
        %904 = vmatprep.subr.mxu0 0.0
        %905 = vmatpush1.msra.mxu0 0.0
        %906 = vmatprep.subr.mxu0 0.0
        %907 = vmatpush1.msra.mxu0 0.0
        %908 = vmatprep.subr.mxu0 0.0
        %909 = vmatpush1.msra.mxu0 0.0
        %910 = vmatprep.subr.mxu0 0.0
        %911 = vmatpush1.msra.mxu0 0.0
        %912 = vmatprep.subr.mxu0 0.0
        %913 = vmatpush1.msra.mxu0 0.0
        %914 = vmatprep.subr.mxu0 0.0
        %915 = vmatpush1.msra.mxu0 0.0
        %916 = vmatprep.subr.mxu0 0.0
        %917 = vmatpush1.msra.mxu0 0.0
        %918 = vmatprep.subr.mxu0 0.0
        %919 = vmatpush1.msra.mxu0 0.0
        %920 = vmatprep.subr.mxu0 0.0
        %921 = vmatpush1.msra.mxu0 0.0
        %922 = vmatprep.subr.mxu0 0.0
        %923 = vmatpush1.msra.mxu0 0.0
        %924 = vmatprep.subr.mxu0 0.0
        %925 = vmatpush1.msra.mxu0 0.0
        %926 = vmatprep.subr.mxu0 0.0
        %927 = vmatpush1.msra.mxu0 0.0
        %928 = vmatprep.mubr.f32.mxu0 0.0
        %929 = vmatmul.mubr.f32.gmra.mrb[0].mxu0 %v828
        %v930 = vpop.f32.mrb[0].mxu0
        %v931 = vadd.f32 %v863, %v930
        %v932 = vpop.f32.mrb[0].mxu0
        %933 = vmatprep.mubr.f32.mxu0 0.0
        %934 = vmatmul.mubr.f32.gmra.mrb[0].mxu0 %v829
        %v935 = vpop.f32.mrb[0].mxu0
        %v936 = vadd.f32 %v863, %v935
        %v937 = vpop.f32.mrb[0].mxu0
        %938 = vmatprep.mubr.f32.mxu0 0.0
        %939 = vmatmul.mubr.f32.gmra.mrb[0].mxu0 %v830
        %v940 = vpop.f32.mrb[0].mxu0
        %v941 = vadd.f32 %v863, %v940
        %v942 = vpop.f32.mrb[0].mxu0
        %943 = vmatprep.mubr.f32.mxu0 0.0
        %944 = vmatmul.mubr.f32.gmra.mrb[0].mxu0 %v831
        %v945 = vpop.f32.mrb[0].mxu0
        %v946 = vadd.f32 %v863, %v945
        %v947 = vpop.f32.mrb[0].mxu0
        %948 = vmatprep.mubr.f32.mxu0 0.0
        %949 = vmatmul.mubr.f32.gmra.mrb[0].mxu0 %v832
        %v950 = vpop.f32.mrb[0].mxu0
        %v951 = vadd.f32 %v863, %v950
        %v952 = vpop.f32.mrb[0].mxu0
        %953 = vmatprep.mubr.f32.mxu0 0.0
        %954 = vmatmul.mubr.f32.gmra.mrb[0].mxu0 %v833
        %v955 = vpop.f32.mrb[0].mxu0
        %v956 = vadd.f32 %v863, %v955
        %v957 = vpop.f32.mrb[0].mxu0
        %958 = vmatprep.mubr.f32.mxu0 0.0
        %959 = vmatmul.mubr.f32.gmra.mrb[0].mxu0 %v834
        %v960 = vpop.f32.mrb[0].mxu0
        %v961 = vadd.f32 %v863, %v960
        %v962 = vpop.f32.mrb[0].mxu0
        %963 = vmatprep.mubr.f32.mxu0 0.0
        %964 = vmatmul.mubr.f32.gmra.mrb[0].mxu0 %v835
        %v965 = vpop.f32.mrb[0].mxu0
        %v966 = vadd.f32 %v863, %v965
        %v967 = vpop.f32.mrb[0].mxu0
        %968 = vmatprep.mubr.f32.mxu0 0.0
        %969 = vmatmul.mubr.f32.gmra.mrb[0].mxu0 %v836
        %v970 = vpop.f32.mrb[0].mxu0
        %v971 = vadd.f32 %v863, %v970
        %v972 = vpop.f32.mrb[0].mxu0
        %973 = vmatprep.mubr.f32.mxu0 0.0
        %974 = vmatmul.mubr.f32.gmra.mrb[0].mxu0 %v837
        %v975 = vpop.f32.mrb[0].mxu0
        %v976 = vadd.f32 %v863, %v975
        %v977 = vpop.f32.mrb[0].mxu0
        %978 = vmatprep.mubr.f32.mxu0 0.0
        %979 = vmatmul.mubr.f32.gmra.mrb[0].mxu0 %v838
        %v980 = vpop.f32.mrb[0].mxu0
        %v981 = vadd.f32 %v863, %v980
        %v982 = vpop.f32.mrb[0].mxu0
        %983 = vmatprep.mubr.f32.mxu0 0.0
        %984 = vmatmul.mubr.f32.gmra.mrb[0].mxu0 %v839
        %v985 = vpop.f32.mrb[0].mxu0
        %v986 = vadd.f32 %v863, %v985
        %v987 = vpop.f32.mrb[0].mxu0
        %988 = vmatprep.mubr.f32.mxu0 0.0
        %989 = vmatmul.mubr.f32.gmra.mrb[0].mxu0 %v840
        %v990 = vpop.f32.mrb[0].mxu0
        %v991 = vadd.f32 %v863, %v990
        %v992 = vpop.f32.mrb[0].mxu0
        %993 = vmatprep.mubr.f32.mxu0 0.0
        %994 = vmatmul.mubr.f32.gmra.mrb[0].mxu0 %v841
        %v995 = vpop.f32.mrb[0].mxu0
        %v996 = vadd.f32 %v863, %v995
        %v997 = vpop.f32.mrb[0].mxu0
        %998 = vmatprep.mubr.f32.mxu0 0.0
        %999 = vmatmul.mubr.f32.gmra.mrb[0].mxu0 %v842
        %v1000 = vpop.f32.mrb[0].mxu0
        %v1001 = vadd.f32 %v863, %v1000
        %v1002 = vpop.f32.mrb[0].mxu0
        %1003 = vmatprep.mubr.f32.mxu0 0.0
        %1004 = vmatmul.mubr.f32.gmra.mrb[0].mxu0 %v843
        %v1005 = vpop.f32.mrb[0].mxu0
        %v1006 = vadd.f32 %v863, %v1005
        %v1007 = vpop.f32.mrb[0].mxu0
        %1008 = vdwg.mxu0
        %v1025 = vunpack.c.l.b16 %v804
        %v1026 = vunpack.c.l.b16 %v805
        %v1027 = vunpack.c.l.b16 %v806
        %v1028 = vunpack.c.l.b16 %v807
        %v1029 = vunpack.c.l.b16 %v808
        %v1030 = vunpack.c.l.b16 %v809
        %v1031 = vunpack.c.l.b16 %v810
        %v1032 = vunpack.c.l.b16 %v811
        %v1033 = vunpack.c.l.b16 %v812
        %v1034 = vunpack.c.l.b16 %v813
        %v1035 = vunpack.c.l.b16 %v814
        %v1036 = vunpack.c.l.b16 %v815
        %v1037 = vunpack.c.l.b16 %v816
        %v1038 = vunpack.c.l.b16 %v817
        %v1039 = vunpack.c.l.b16 %v818
        %v1040 = vunpack.c.l.b16 %v819
        %v1041 = vpack.c.b16 %v1026, %v1025
        %v1042 = vpack.c.b16 %v1028, %v1027
        %v1043 = vpack.c.b16 %v1030, %v1029
        %v1044 = vpack.c.b16 %v1032, %v1031
        %v1045 = vpack.c.b16 %v1034, %v1033
        %v1046 = vpack.c.b16 %v1036, %v1035
        %v1047 = vpack.c.b16 %v1038, %v1037
        %v1048 = vpack.c.b16 %v1040, %v1039
        %1057 = vmatprep.subr.bf16.mxu0 0
        %1058 = vmatpush1.bf16.msra.mxu0 %v820
        %1059 = vmatprep.subr.bf16.mxu0 0
        %1060 = vmatpush1.bf16.msra.mxu0 %v821
        %1061 = vmatprep.subr.bf16.mxu0 0
        %1062 = vmatpush1.bf16.msra.mxu0 %v822
        %1063 = vmatprep.subr.bf16.mxu0 0
        %1064 = vmatpush1.bf16.msra.mxu0 %v823
        %1065 = vmatprep.subr.bf16.mxu0 0
        %1066 = vmatpush1.bf16.msra.mxu0 %v824
        %1067 = vmatprep.subr.bf16.mxu0 0
        %1068 = vmatpush1.bf16.msra.mxu0 %v825
        %1069 = vmatprep.subr.bf16.mxu0 0
        %1070 = vmatpush1.bf16.msra.mxu0 %v826
        %1071 = vmatprep.subr.bf16.mxu0 0
        %1072 = vmatpush1.bf16.msra.mxu0 %v827
        %1073 = vmatprep.subr.bf16.mxu0 0
        %1074 = vmatpush1.bf16.msra.mxu0 0
        %1075 = vmatprep.subr.bf16.mxu0 0
        %1076 = vmatpush1.bf16.msra.mxu0 0
        %1077 = vmatprep.subr.bf16.mxu0 0
        %1078 = vmatpush1.bf16.msra.mxu0 0
        %1079 = vmatprep.subr.bf16.mxu0 0
        %1080 = vmatpush1.bf16.msra.mxu0 0
        %1081 = vmatprep.subr.bf16.mxu0 0
        %1082 = vmatpush1.bf16.msra.mxu0 0
        %1083 = vmatprep.subr.bf16.mxu0 0
        %1084 = vmatpush1.bf16.msra.mxu0 0
        %1085 = vmatprep.subr.bf16.mxu0 0
        %1086 = vmatpush1.bf16.msra.mxu0 0
        %1087 = vmatprep.subr.bf16.mxu0 0
        %1088 = vmatpush1.bf16.msra.mxu0 0
        %1089 = vmatprep.mubr.bf16.mxu0 0
        %1090 = vmatmul.mubr.bf16.gmra.mrb[0].mxu0 %v1041
        %v1091 = vpop.f32.mrb[0].mxu0
        %v1092 = vadd.f32 %v931, %v1091
        %v1093 = vpop.f32.mrb[0].mxu0
        %v1094 = vpop.f32.mrb[0].mxu0
        %v1095 = vadd.f32 %v936, %v1094
        %v1096 = vpop.f32.mrb[0].mxu0
        %1097 = vmatprep.mubr.bf16.mxu0 0
        %1098 = vmatmul.mubr.bf16.gmra.mrb[0].mxu0 %v1042
        %v1099 = vpop.f32.mrb[0].mxu0
        %v1100 = vadd.f32 %v941, %v1099
        %v1101 = vpop.f32.mrb[0].mxu0
        %v1102 = vpop.f32.mrb[0].mxu0
        %v1103 = vadd.f32 %v946, %v1102
        %v1104 = vpop.f32.mrb[0].mxu0
        %1105 = vmatprep.mubr.bf16.mxu0 0
        %1106 = vmatmul.mubr.bf16.gmra.mrb[0].mxu0 %v1043
        %v1107 = vpop.f32.mrb[0].mxu0
        %v1108 = vadd.f32 %v951, %v1107
        %v1109 = vpop.f32.mrb[0].mxu0
        %v1110 = vpop.f32.mrb[0].mxu0
        %v1111 = vadd.f32 %v956, %v1110
        %v1112 = vpop.f32.mrb[0].mxu0
        %1113 = vmatprep.mubr.bf16.mxu0 0
        %1114 = vmatmul.mubr.bf16.gmra.mrb[0].mxu0 %v1044
        %v1115 = vpop.f32.mrb[0].mxu0
        %v1116 = vadd.f32 %v961, %v1115
        %v1117 = vpop.f32.mrb[0].mxu0
        %v1118 = vpop.f32.mrb[0].mxu0
        %v1119 = vadd.f32 %v966, %v1118
        %v1120 = vpop.f32.mrb[0].mxu0
        %1121 = vmatprep.mubr.bf16.mxu0 0
        %1122 = vmatmul.mubr.bf16.gmra.mrb[0].mxu0 %v1045
        %v1123 = vpop.f32.mrb[0].mxu0
        %v1124 = vadd.f32 %v971, %v1123
        %v1125 = vpop.f32.mrb[0].mxu0
        %v1126 = vpop.f32.mrb[0].mxu0
        %v1127 = vadd.f32 %v976, %v1126
        %v1128 = vpop.f32.mrb[0].mxu0
        %1129 = vmatprep.mubr.bf16.mxu0 0
        %1130 = vmatmul.mubr.bf16.gmra.mrb[0].mxu0 %v1046
        %v1131 = vpop.f32.mrb[0].mxu0
        %v1132 = vadd.f32 %v981, %v1131
        %v1133 = vpop.f32.mrb[0].mxu0
        %v1134 = vpop.f32.mrb[0].mxu0
        %v1135 = vadd.f32 %v986, %v1134
        %v1136 = vpop.f32.mrb[0].mxu0
        %1137 = vmatprep.mubr.bf16.mxu0 0
        %1138 = vmatmul.mubr.bf16.gmra.mrb[0].mxu0 %v1047
        %v1139 = vpop.f32.mrb[0].mxu0
        %v1140 = vadd.f32 %v991, %v1139
        %v1141 = vpop.f32.mrb[0].mxu0
        %v1142 = vpop.f32.mrb[0].mxu0
        %v1143 = vadd.f32 %v996, %v1142
        %v1144 = vpop.f32.mrb[0].mxu0
        %1145 = vmatprep.mubr.bf16.mxu0 0
        %1146 = vmatmul.mubr.bf16.gmra.mrb[0].mxu0 %v1048
        %v1147 = vpop.f32.mrb[0].mxu0
        %v1148 = vadd.f32 %v1001, %v1147
        %v1149 = vpop.f32.mrb[0].mxu0
        %v1150 = vpop.f32.mrb[0].mxu0
        %v1151 = vadd.f32 %v1006, %v1150
        %v1152 = vpop.f32.mrb[0].mxu0
        %1153 = vdwg.mxu0
        %v1154 = vmax.f32 %v1092, 0.0
        %v1155 = vmax.f32 %v1095, 0.0
        %v1156 = vmax.f32 %v1100, 0.0
        %v1157 = vmax.f32 %v1103, 0.0
        %v1158 = vmax.f32 %v1108, 0.0
        %v1159 = vmax.f32 %v1111, 0.0
        %v1160 = vmax.f32 %v1116, 0.0
        %v1161 = vmax.f32 %v1119, 0.0
        %v1162 = vmax.f32 %v1124, 0.0
        %v1163 = vmax.f32 %v1127, 0.0
        %v1164 = vmax.f32 %v1132, 0.0
        %v1165 = vmax.f32 %v1135, 0.0
        %v1166 = vmax.f32 %v1140, 0.0
        %v1167 = vmax.f32 %v1143, 0.0
        %v1168 = vmax.f32 %v1148, 0.0
        %v1169 = vmax.f32 %v1151, 0.0
        %v1170 = vpack.c.bf16 %v1155, %v1154
        %v1171 = vpack.c.bf16 %v1157, %v1156
        %v1172 = vpack.c.bf16 %v1159, %v1158
        %v1173 = vpack.c.bf16 %v1161, %v1160
        %v1174 = vpack.c.bf16 %v1163, %v1162
        %v1175 = vpack.c.bf16 %v1165, %v1164
        %v1176 = vpack.c.bf16 %v1167, %v1166
        %v1177 = vpack.c.bf16 %v1169, %v1168
        %v1178 = vld [vmem:[#allocation4] sm:$0xff]
        %v1179 = vld [vmem:[#allocation4 + $0x8] sm:$0xff]
        %v1180 = vld [vmem:[#allocation4 + $0x10] sm:$0xff]
        %v1181 = vld [vmem:[#allocation4 + $0x18] sm:$0xff]
        %v1182 = vld [vmem:[#allocation4 + $0x20] sm:$0xff]
        %v1183 = vld [vmem:[#allocation4 + $0x28] sm:$0xff]
        %v1184 = vld [vmem:[#allocation4 + $0x30] sm:$0xff]
        %v1185 = vld [vmem:[#allocation4 + $0x38] sm:$0xff]
        %v1186 = vld [vmem:[#allocation4 + $0x40] sm:$0xff]
        %v1187 = vld [vmem:[#allocation4 + $0x48] sm:$0xff]
        %v1188 = vld [vmem:[#allocation4 + $0x50] sm:$0xff]
        %v1189 = vld [vmem:[#allocation4 + $0x58] sm:$0xff]
        %v1190 = vld [vmem:[#allocation4 + $0x60] sm:$0xff]
        %v1191 = vld [vmem:[#allocation4 + $0x68] sm:$0xff]
        %v1192 = vld [vmem:[#allocation4 + $0x70] sm:$0xff]
        %v1193 = vld [vmem:[#allocation4 + $0x78] sm:$0xff]
        %v1194 = vld [vmem:[%s598] sm:$0xf]
        %v1195 = vld [vmem:[%s598 + $0x4] sm:$0xf]
        %v1196 = vld [vmem:[%s598 + $0x8] sm:$0xf]
        %v1197 = vld [vmem:[%s598 + $0xc] sm:$0xf]
        %v1198 = vld [vmem:[%s598 + $0x10] sm:$0xf]
        %v1199 = vld [vmem:[%s598 + $0x14] sm:$0xf]
        %v1200 = vld [vmem:[%s598 + $0x18] sm:$0xf]
        %v1201 = vld [vmem:[%s598 + $0x1c] sm:$0xf]
        %v1202 = vld [vmem:[%s598 + $0x20] sm:$0xf]
        %v1203 = vld [vmem:[%s598 + $0x24] sm:$0xf]
        %v1204 = vld [vmem:[%s598 + $0x28] sm:$0xf]
        %v1205 = vld [vmem:[%s598 + $0x2c] sm:$0xf]
        %v1206 = vld [vmem:[%s598 + $0x30] sm:$0xf]
        %v1207 = vld [vmem:[%s598 + $0x34] sm:$0xf]
        %v1208 = vld [vmem:[%s598 + $0x38] sm:$0xf]
        %v1209 = vld [vmem:[%s598 + $0x3c] sm:$0xf]
        %v1226 = vunpack.c.l.b16 %v1194
        %v1227 = vunpack.c.l.b16 %v1195
        %v1228 = vunpack.c.l.b16 %v1196
        %v1229 = vunpack.c.l.b16 %v1197
        %v1230 = vunpack.c.l.b16 %v1198
        %v1231 = vunpack.c.l.b16 %v1199
        %v1232 = vunpack.c.l.b16 %v1200
        %v1233 = vunpack.c.l.b16 %v1201
        %v1234 = vunpack.c.l.b16 %v1202
        %v1235 = vunpack.c.l.b16 %v1203
        %v1236 = vunpack.c.l.b16 %v1204
        %v1237 = vunpack.c.l.b16 %v1205
        %v1238 = vunpack.c.l.b16 %v1206
        %v1239 = vunpack.c.l.b16 %v1207
        %v1240 = vunpack.c.l.b16 %v1208
        %v1241 = vunpack.c.l.b16 %v1209
        %v1242 = vpack.c.b16 %v1227, %v1226
        %v1243 = vpack.c.b16 %v1229, %v1228
        %v1244 = vpack.c.b16 %v1231, %v1230
        %v1245 = vpack.c.b16 %v1233, %v1232
        %v1246 = vpack.c.b16 %v1235, %v1234
        %v1247 = vpack.c.b16 %v1237, %v1236
        %v1248 = vpack.c.b16 %v1239, %v1238
        %v1249 = vpack.c.b16 %v1241, %v1240
        %1258 = vmatprep.subr.bf16.mxu0 0
        %1259 = vmatpush1.bf16.msra.mxu0 %v1170
        %1260 = vmatprep.subr.bf16.mxu0 0
        %1261 = vmatpush1.bf16.msra.mxu0 %v1171
        %1262 = vmatprep.subr.bf16.mxu0 0
        %1263 = vmatpush1.bf16.msra.mxu0 %v1172
        %1264 = vmatprep.subr.bf16.mxu0 0
        %1265 = vmatpush1.bf16.msra.mxu0 %v1173
        %1266 = vmatprep.subr.bf16.mxu0 0
        %1267 = vmatpush1.bf16.msra.mxu0 %v1174
        %1268 = vmatprep.subr.bf16.mxu0 0
        %1269 = vmatpush1.bf16.msra.mxu0 %v1175
        %1270 = vmatprep.subr.bf16.mxu0 0
        %1271 = vmatpush1.bf16.msra.mxu0 %v1176
        %1272 = vmatprep.subr.bf16.mxu0 0
        %1273 = vmatpush1.bf16.msra.mxu0 %v1177
        %1274 = vmatprep.subr.bf16.mxu0 0
        %1275 = vmatpush1.bf16.msra.mxu0 0
        %1276 = vmatprep.subr.bf16.mxu0 0
        %1277 = vmatpush1.bf16.msra.mxu0 0
        %1278 = vmatprep.subr.bf16.mxu0 0
        %1279 = vmatpush1.bf16.msra.mxu0 0
        %1280 = vmatprep.subr.bf16.mxu0 0
        %1281 = vmatpush1.bf16.msra.mxu0 0
        %1282 = vmatprep.subr.bf16.mxu0 0
        %1283 = vmatpush1.bf16.msra.mxu0 0
        %1284 = vmatprep.subr.bf16.mxu0 0
        %1285 = vmatpush1.bf16.msra.mxu0 0
        %1286 = vmatprep.subr.bf16.mxu0 0
        %1287 = vmatpush1.bf16.msra.mxu0 0
        %1288 = vmatprep.subr.bf16.mxu0 0
        %1289 = vmatpush1.bf16.msra.mxu0 0
        %1290 = vmatprep.mubr.bf16.mxu0 0
        %1291 = vmatmul.mubr.bf16.gmra.mrb[0].mxu0 %v1242
        %v1292 = vpop.f32.mrb[0].mxu0
        %v1293 = vadd.f32 0.0, %v1292
        %v1294 = vpop.f32.mrb[0].mxu0
        %v1295 = vpop.f32.mrb[0].mxu0
        %v1296 = vadd.f32 0.0, %v1295
        %v1297 = vpop.f32.mrb[0].mxu0
        %1298 = vmatprep.mubr.bf16.mxu0 0
        %1299 = vmatmul.mubr.bf16.gmra.mrb[0].mxu0 %v1243
        %v1300 = vpop.f32.mrb[0].mxu0
        %v1301 = vadd.f32 0.0, %v1300
        %v1302 = vpop.f32.mrb[0].mxu0
        %v1303 = vpop.f32.mrb[0].mxu0
        %v1304 = vadd.f32 0.0, %v1303
        %v1305 = vpop.f32.mrb[0].mxu0
        %1306 = vmatprep.mubr.bf16.mxu0 0
        %1307 = vmatmul.mubr.bf16.gmra.mrb[0].mxu0 %v1244
        %v1308 = vpop.f32.mrb[0].mxu0
        %v1309 = vadd.f32 0.0, %v1308
        %v1310 = vpop.f32.mrb[0].mxu0
        %v1311 = vpop.f32.mrb[0].mxu0
        %v1312 = vadd.f32 0.0, %v1311
        %v1313 = vpop.f32.mrb[0].mxu0
        %1314 = vmatprep.mubr.bf16.mxu0 0
        %1315 = vmatmul.mubr.bf16.gmra.mrb[0].mxu0 %v1245
        %v1316 = vpop.f32.mrb[0].mxu0
        %v1317 = vadd.f32 0.0, %v1316
        %v1318 = vpop.f32.mrb[0].mxu0
        %v1319 = vpop.f32.mrb[0].mxu0
        %v1320 = vadd.f32 0.0, %v1319
        %v1321 = vpop.f32.mrb[0].mxu0
        %1322 = vmatprep.mubr.bf16.mxu0 0
        %1323 = vmatmul.mubr.bf16.gmra.mrb[0].mxu0 %v1246
        %v1324 = vpop.f32.mrb[0].mxu0
        %v1325 = vadd.f32 0.0, %v1324
        %v1326 = vpop.f32.mrb[0].mxu0
        %v1327 = vpop.f32.mrb[0].mxu0
        %v1328 = vadd.f32 0.0, %v1327
        %v1329 = vpop.f32.mrb[0].mxu0
        %1330 = vmatprep.mubr.bf16.mxu0 0
        %1331 = vmatmul.mubr.bf16.gmra.mrb[0].mxu0 %v1247
        %v1332 = vpop.f32.mrb[0].mxu0
        %v1333 = vadd.f32 0.0, %v1332
        %v1334 = vpop.f32.mrb[0].mxu0
        %v1335 = vpop.f32.mrb[0].mxu0
        %v1336 = vadd.f32 0.0, %v1335
        %v1337 = vpop.f32.mrb[0].mxu0
        %1338 = vmatprep.mubr.bf16.mxu0 0
        %1339 = vmatmul.mubr.bf16.gmra.mrb[0].mxu0 %v1248
        %v1340 = vpop.f32.mrb[0].mxu0
        %v1341 = vadd.f32 0.0, %v1340
        %v1342 = vpop.f32.mrb[0].mxu0
        %v1343 = vpop.f32.mrb[0].mxu0
        %v1344 = vadd.f32 0.0, %v1343
        %v1345 = vpop.f32.mrb[0].mxu0
        %1346 = vmatprep.mubr.bf16.mxu0 0
        %1347 = vmatmul.mubr.bf16.gmra.mrb[0].mxu0 %v1249
        %v1348 = vpop.f32.mrb[0].mxu0
        %v1349 = vadd.f32 0.0, %v1348
        %v1350 = vpop.f32.mrb[0].mxu0
        %v1351 = vpop.f32.mrb[0].mxu0
        %v1352 = vadd.f32 0.0, %v1351
        %v1353 = vpop.f32.mrb[0].mxu0
        %1354 = vdwg.mxu0
        %v1355 = vadd.f32 %v1178, %v1293
        %v1356 = vadd.f32 %v1179, %v1296
        %v1357 = vadd.f32 %v1180, %v1301
        %v1358 = vadd.f32 %v1181, %v1304
        %v1359 = vadd.f32 %v1182, %v1309
        %v1360 = vadd.f32 %v1183, %v1312
        %v1361 = vadd.f32 %v1184, %v1317
        %v1362 = vadd.f32 %v1185, %v1320
        %v1363 = vadd.f32 %v1186, %v1325
        %v1364 = vadd.f32 %v1187, %v1328
        %v1365 = vadd.f32 %v1188, %v1333
        %v1366 = vadd.f32 %v1189, %v1336
        %v1367 = vadd.f32 %v1190, %v1341
        %v1368 = vadd.f32 %v1191, %v1344
        %v1369 = vadd.f32 %v1192, %v1349
        %v1370 = vadd.f32 %v1193, %v1352
        %1371 = vst [vmem:[#allocation4] sm:$0xff] %v1355
        %1372 = vst [vmem:[#allocation4 + $0x8] sm:$0xff] %v1356
        %1373 = vst [vmem:[#allocation4 + $0x10] sm:$0xff] %v1357
        %1374 = vst [vmem:[#allocation4 + $0x18] sm:$0xff] %v1358
        %1375 = vst [vmem:[#allocation4 + $0x20] sm:$0xff] %v1359
        %1376 = vst [vmem:[#allocation4 + $0x28] sm:$0xff] %v1360
        %1377 = vst [vmem:[#allocation4 + $0x30] sm:$0xff] %v1361
        %1378 = vst [vmem:[#allocation4 + $0x38] sm:$0xff] %v1362
        %1379 = vst [vmem:[#allocation4 + $0x40] sm:$0xff] %v1363
        %1380 = vst [vmem:[#allocation4 + $0x48] sm:$0xff] %v1364
        %1381 = vst [vmem:[#allocation4 + $0x50] sm:$0xff] %v1365
        %1382 = vst [vmem:[#allocation4 + $0x58] sm:$0xff] %v1366
        %1383 = vst [vmem:[#allocation4 + $0x60] sm:$0xff] %v1367
        %1384 = vst [vmem:[#allocation4 + $0x68] sm:$0xff] %v1368
        %1385 = vst [vmem:[#allocation4 + $0x70] sm:$0xff] %v1369
        %1386 = vst [vmem:[#allocation4 + $0x78] sm:$0xff] %v1370
        %p1387 = scmp.eq.s32.totalorder %s45, 2
        // Predicated region
        $region129: #{tpu_custom_call.1} parent=67 // pred_check
          %p1388 = pneg %p1387
        $region130: #{tpu_custom_call.1} parent=67 // pred_check_branch
          %1390 = sbr.rel (%p1388) target = $region132
        $region131: #{tpu_custom_call.1} parent=67 // pred_region
          %v1391 = vlaneseq
          %v1392 = vand.u32 %v1391, 127
          %vm1393 = vcmp.lt.s32.totalorder %v1392, 24
          %v1394 = vsel %vm1393, 1, 0
          %v1395 = vcvt.s32.f32 %v1394
          %v1396 = vld [vmem:[#allocation2] sm:$0xff]
          %v1397 = vld [vmem:[#allocation2 + $0x8] sm:$0xff]
          %v1398 = vld [vmem:[#allocation2 + $0x10] sm:$0xff]
          %v1399 = vld [vmem:[#allocation2 + $0x18] sm:$0xff]
          %v1400 = vld [vmem:[#allocation2 + $0x20] sm:$0xff]
          %v1401 = vld [vmem:[#allocation2 + $0x28] sm:$0xff]
          %v1402 = vld [vmem:[#allocation2 + $0x30] sm:$0xff]
          %v1403 = vld [vmem:[#allocation2 + $0x38] sm:$0xff]
          %v1404 = vld [vmem:[#allocation2 + $0x40] sm:$0xff]
          %v1405 = vld [vmem:[#allocation2 + $0x48] sm:$0xff]
          %v1406 = vld [vmem:[#allocation2 + $0x50] sm:$0xff]
          %v1407 = vld [vmem:[#allocation2 + $0x58] sm:$0xff]
          %v1408 = vld [vmem:[#allocation2 + $0x60] sm:$0xff]
          %v1409 = vld [vmem:[#allocation2 + $0x68] sm:$0xff]
          %v1410 = vld [vmem:[#allocation2 + $0x70] sm:$0xff]
          %v1411 = vld [vmem:[#allocation2 + $0x78] sm:$0xff]
          %v1412 = vld [vmem:[#allocation4] sm:$0xff]
          %v1413 = vld [vmem:[#allocation4 + $0x8] sm:$0xff]
          %v1414 = vld [vmem:[#allocation4 + $0x10] sm:$0xff]
          %v1415 = vld [vmem:[#allocation4 + $0x18] sm:$0xff]
          %v1416 = vld [vmem:[#allocation4 + $0x20] sm:$0xff]
          %v1417 = vld [vmem:[#allocation4 + $0x28] sm:$0xff]
          %v1418 = vld [vmem:[#allocation4 + $0x30] sm:$0xff]
          %v1419 = vld [vmem:[#allocation4 + $0x38] sm:$0xff]
          %v1420 = vld [vmem:[#allocation4 + $0x40] sm:$0xff]
          %v1421 = vld [vmem:[#allocation4 + $0x48] sm:$0xff]
          %v1422 = vld [vmem:[#allocation4 + $0x50] sm:$0xff]
          %v1423 = vld [vmem:[#allocation4 + $0x58] sm:$0xff]
          %v1424 = vld [vmem:[#allocation4 + $0x60] sm:$0xff]
          %v1425 = vld [vmem:[#allocation4 + $0x68] sm:$0xff]
          %v1426 = vld [vmem:[#allocation4 + $0x70] sm:$0xff]
          %v1427 = vld [vmem:[#allocation4 + $0x78] sm:$0xff]
          %v1428 = vadd.f32 %v1396, %v1412
          %v1429 = vadd.f32 %v1397, %v1413
          %v1430 = vadd.f32 %v1398, %v1414
          %v1431 = vadd.f32 %v1399, %v1415
          %v1432 = vadd.f32 %v1400, %v1416
          %v1433 = vadd.f32 %v1401, %v1417
          %v1434 = vadd.f32 %v1402, %v1418
          %v1435 = vadd.f32 %v1403, %v1419
          %v1436 = vadd.f32 %v1404, %v1420
          %v1437 = vadd.f32 %v1405, %v1421
          %v1438 = vadd.f32 %v1406, %v1422
          %v1439 = vadd.f32 %v1407, %v1423
          %v1440 = vadd.f32 %v1408, %v1424
          %v1441 = vadd.f32 %v1409, %v1425
          %v1442 = vadd.f32 %v1410, %v1426
          %v1443 = vadd.f32 %v1411, %v1427
          %1444 = vst [vmem:[#allocation4] sm:$0xff] %v1428
          %1445 = vst [vmem:[#allocation4 + $0x8] sm:$0xff] %v1429
          %1446 = vst [vmem:[#allocation4 + $0x10] sm:$0xff] %v1430
          %1447 = vst [vmem:[#allocation4 + $0x18] sm:$0xff] %v1431
          %1448 = vst [vmem:[#allocation4 + $0x20] sm:$0xff] %v1432
          %1449 = vst [vmem:[#allocation4 + $0x28] sm:$0xff] %v1433
          %1450 = vst [vmem:[#allocation4 + $0x30] sm:$0xff] %v1434
          %1451 = vst [vmem:[#allocation4 + $0x38] sm:$0xff] %v1435
          %1452 = vst [vmem:[#allocation4 + $0x40] sm:$0xff] %v1436
          %1453 = vst [vmem:[#allocation4 + $0x48] sm:$0xff] %v1437
          %1454 = vst [vmem:[#allocation4 + $0x50] sm:$0xff] %v1438
          %1455 = vst [vmem:[#allocation4 + $0x58] sm:$0xff] %v1439
          %1456 = vst [vmem:[#allocation4 + $0x60] sm:$0xff] %v1440
          %1457 = vst [vmem:[#allocation4 + $0x68] sm:$0xff] %v1441
          %1458 = vst [vmem:[#allocation4 + $0x70] sm:$0xff] %v1442
          %1459 = vst [vmem:[#allocation4 + $0x78] sm:$0xff] %v1443
          %v1460 = vld [vmem:[#allocation4] sm:$0xff]
          %v1461 = vld [vmem:[#allocation4 + $0x8] sm:$0xff]
          %v1462 = vld [vmem:[#allocation4 + $0x10] sm:$0xff]
          %v1463 = vld [vmem:[#allocation4 + $0x18] sm:$0xff]
          %v1464 = vld [vmem:[#allocation4 + $0x20] sm:$0xff]
          %v1465 = vld [vmem:[#allocation4 + $0x28] sm:$0xff]
          %v1466 = vld [vmem:[#allocation4 + $0x30] sm:$0xff]
          %v1467 = vld [vmem:[#allocation4 + $0x38] sm:$0xff]
          %v1468 = vld [vmem:[#allocation4 + $0x40] sm:$0xff]
          %v1469 = vld [vmem:[#allocation4 + $0x48] sm:$0xff]
          %v1470 = vld [vmem:[#allocation4 + $0x50] sm:$0xff]
          %v1471 = vld [vmem:[#allocation4 + $0x58] sm:$0xff]
          %v1472 = vld [vmem:[#allocation4 + $0x60] sm:$0xff]
          %v1473 = vld [vmem:[#allocation4 + $0x68] sm:$0xff]
          %v1474 = vld [vmem:[#allocation4 + $0x70] sm:$0xff]
          %v1475 = vld [vmem:[#allocation4 + $0x78] sm:$0xff]
          %v1476 = vld [vmem:[%s625] sm:$0xff]
          %v1477 = vld [vmem:[%s625 + $0x8] sm:$0xff]
          %v1478 = vld [vmem:[%s625 + $0x10] sm:$0xff]
          %v1479 = vld [vmem:[%s625 + $0x18] sm:$0xff]
          %v1480 = vld [vmem:[%s625 + $0x20] sm:$0xff]
          %v1481 = vld [vmem:[%s625 + $0x28] sm:$0xff]
          %v1482 = vld [vmem:[%s625 + $0x30] sm:$0xff]
          %v1483 = vld [vmem:[%s625 + $0x38] sm:$0xff]
          %v1484 = vld [vmem:[%s625 + $0x40] sm:$0xff]
          %v1485 = vld [vmem:[%s625 + $0x48] sm:$0xff]
          %v1486 = vld [vmem:[%s625 + $0x50] sm:$0xff]
          %v1487 = vld [vmem:[%s625 + $0x58] sm:$0xff]
          %v1488 = vld [vmem:[%s625 + $0x60] sm:$0xff]
          %v1489 = vld [vmem:[%s625 + $0x68] sm:$0xff]
          %v1490 = vld [vmem:[%s625 + $0x70] sm:$0xff]
          %v1491 = vld [vmem:[%s625 + $0x78] sm:$0xff]
          %v1492 = vlaneseq
          %v1493 = vshrl.u32 %v1492, 7
          %v1494 = vsub.s32 1, %v1493
          %v1495 = vrot.slane %v803, %v1494
          %1496 = vmatprep.subr.mxu0 0.0
          %1497 = vmatpush1.msra.mxu0 %v1476
          %1498 = vmatprep.subr.mxu0 0.0
          %1499 = vmatpush1.msra.mxu0 %v1477
          %1500 = vmatprep.subr.mxu0 0.0
          %1501 = vmatpush1.msra.mxu0 %v1478
          %1502 = vmatprep.subr.mxu0 0.0
          %1503 = vmatpush1.msra.mxu0 %v1479
          %1504 = vmatprep.subr.mxu0 0.0
          %1505 = vmatpush1.msra.mxu0 %v1480
          %1506 = vmatprep.subr.mxu0 0.0
          %1507 = vmatpush1.msra.mxu0 %v1481
          %1508 = vmatprep.subr.mxu0 0.0
          %1509 = vmatpush1.msra.mxu0 %v1482
          %1510 = vmatprep.subr.mxu0 0.0
          %1511 = vmatpush1.msra.mxu0 %v1483
          %1512 = vmatprep.subr.mxu0 0.0
          %1513 = vmatpush1.msra.mxu0 %v1484
          %1514 = vmatprep.subr.mxu0 0.0
          %1515 = vmatpush1.msra.mxu0 %v1485
          %1516 = vmatprep.subr.mxu0 0.0
          %1517 = vmatpush1.msra.mxu0 %v1486
          %1518 = vmatprep.subr.mxu0 0.0
          %1519 = vmatpush1.msra.mxu0 %v1487
          %1520 = vmatprep.subr.mxu0 0.0
          %1521 = vmatpush1.msra.mxu0 %v1488
          %1522 = vmatprep.subr.mxu0 0.0
          %1523 = vmatpush1.msra.mxu0 %v1489
          %1524 = vmatprep.subr.mxu0 0.0
          %1525 = vmatpush1.msra.mxu0 %v1490
          %1526 = vmatprep.subr.mxu0 0.0
          %1527 = vmatpush1.msra.mxu0 %v1491
          %1528 = vmatprep.subr.mxu0 0.0
          %1529 = vmatpush1.msra.mxu0 0.0
          %1530 = vmatprep.subr.mxu0 0.0
          %1531 = vmatpush1.msra.mxu0 0.0
          %1532 = vmatprep.subr.mxu0 0.0
          %1533 = vmatpush1.msra.mxu0 0.0
          %1534 = vmatprep.subr.mxu0 0.0
          %1535 = vmatpush1.msra.mxu0 0.0
          %1536 = vmatprep.subr.mxu0 0.0
          %1537 = vmatpush1.msra.mxu0 0.0
          %1538 = vmatprep.subr.mxu0 0.0
          %1539 = vmatpush1.msra.mxu0 0.0
          %1540 = vmatprep.subr.mxu0 0.0
          %1541 = vmatpush1.msra.mxu0 0.0
          %1542 = vmatprep.subr.mxu0 0.0
          %1543 = vmatpush1.msra.mxu0 0.0
          %1544 = vmatprep.subr.mxu0 0.0
          %1545 = vmatpush1.msra.mxu0 0.0
          %1546 = vmatprep.subr.mxu0 0.0
          %1547 = vmatpush1.msra.mxu0 0.0
          %1548 = vmatprep.subr.mxu0 0.0
          %1549 = vmatpush1.msra.mxu0 0.0
          %1550 = vmatprep.subr.mxu0 0.0
          %1551 = vmatpush1.msra.mxu0 0.0
          %1552 = vmatprep.subr.mxu0 0.0
          %1553 = vmatpush1.msra.mxu0 0.0
          %1554 = vmatprep.subr.mxu0 0.0
          %1555 = vmatpush1.msra.mxu0 0.0
          %1556 = vmatprep.subr.mxu0 0.0
          %1557 = vmatpush1.msra.mxu0 0.0
          %1558 = vmatprep.subr.mxu0 0.0
          %1559 = vmatpush1.msra.mxu0 0.0
          %1560 = vmatprep.mubr.f32.mxu0 0.0
          %1561 = vmatmul.mubr.f32.gmra.mrb[0].mxu0 %v1460
          %v1562 = vpop.f32.mrb[0].mxu0
          %v1563 = vadd.f32 %v1495, %v1562
          %v1564 = vpop.f32.mrb[0].mxu0
          %1565 = vmatprep.mubr.f32.mxu0 0.0
          %1566 = vmatmul.mubr.f32.gmra.mrb[0].mxu0 %v1461
          %v1567 = vpop.f32.mrb[0].mxu0
          %v1568 = vadd.f32 %v1495, %v1567
          %v1569 = vpop.f32.mrb[0].mxu0
          %1570 = vmatprep.mubr.f32.mxu0 0.0
          %1571 = vmatmul.mubr.f32.gmra.mrb[0].mxu0 %v1462
          %v1572 = vpop.f32.mrb[0].mxu0
          %v1573 = vadd.f32 %v1495, %v1572
          %v1574 = vpop.f32.mrb[0].mxu0
          %1575 = vmatprep.mubr.f32.mxu0 0.0
          %1576 = vmatmul.mubr.f32.gmra.mrb[0].mxu0 %v1463
          %v1577 = vpop.f32.mrb[0].mxu0
          %v1578 = vadd.f32 %v1495, %v1577
          %v1579 = vpop.f32.mrb[0].mxu0
          %1580 = vmatprep.mubr.f32.mxu0 0.0
          %1581 = vmatmul.mubr.f32.gmra.mrb[0].mxu0 %v1464
          %v1582 = vpop.f32.mrb[0].mxu0
          %v1583 = vadd.f32 %v1495, %v1582
          %v1584 = vpop.f32.mrb[0].mxu0
          %1585 = vmatprep.mubr.f32.mxu0 0.0
          %1586 = vmatmul.mubr.f32.gmra.mrb[0].mxu0 %v1465
          %v1587 = vpop.f32.mrb[0].mxu0
          %v1588 = vadd.f32 %v1495, %v1587
          %v1589 = vpop.f32.mrb[0].mxu0
          %1590 = vmatprep.mubr.f32.mxu0 0.0
          %1591 = vmatmul.mubr.f32.gmra.mrb[0].mxu0 %v1466
          %v1592 = vpop.f32.mrb[0].mxu0
          %v1593 = vadd.f32 %v1495, %v1592
          %v1594 = vpop.f32.mrb[0].mxu0
          %1595 = vmatprep.mubr.f32.mxu0 0.0
          %1596 = vmatmul.mubr.f32.gmra.mrb[0].mxu0 %v1467
          %v1597 = vpop.f32.mrb[0].mxu0
          %v1598 = vadd.f32 %v1495, %v1597
          %v1599 = vpop.f32.mrb[0].mxu0
          %1600 = vmatprep.mubr.f32.mxu0 0.0
          %1601 = vmatmul.mubr.f32.gmra.mrb[0].mxu0 %v1468
          %v1602 = vpop.f32.mrb[0].mxu0
          %v1603 = vadd.f32 %v1495, %v1602
          %v1604 = vpop.f32.mrb[0].mxu0
          %1605 = vmatprep.mubr.f32.mxu0 0.0
          %1606 = vmatmul.mubr.f32.gmra.mrb[0].mxu0 %v1469
          %v1607 = vpop.f32.mrb[0].mxu0
          %v1608 = vadd.f32 %v1495, %v1607
          %v1609 = vpop.f32.mrb[0].mxu0
          %1610 = vmatprep.mubr.f32.mxu0 0.0
          %1611 = vmatmul.mubr.f32.gmra.mrb[0].mxu0 %v1470
          %v1612 = vpop.f32.mrb[0].mxu0
          %v1613 = vadd.f32 %v1495, %v1612
          %v1614 = vpop.f32.mrb[0].mxu0
          %1615 = vmatprep.mubr.f32.mxu0 0.0
          %1616 = vmatmul.mubr.f32.gmra.mrb[0].mxu0 %v1471
          %v1617 = vpop.f32.mrb[0].mxu0
          %v1618 = vadd.f32 %v1495, %v1617
          %v1619 = vpop.f32.mrb[0].mxu0
          %1620 = vmatprep.mubr.f32.mxu0 0.0
          %1621 = vmatmul.mubr.f32.gmra.mrb[0].mxu0 %v1472
          %v1622 = vpop.f32.mrb[0].mxu0
          %v1623 = vadd.f32 %v1495, %v1622
          %v1624 = vpop.f32.mrb[0].mxu0
          %1625 = vmatprep.mubr.f32.mxu0 0.0
          %1626 = vmatmul.mubr.f32.gmra.mrb[0].mxu0 %v1473
          %v1627 = vpop.f32.mrb[0].mxu0
          %v1628 = vadd.f32 %v1495, %v1627
          %v1629 = vpop.f32.mrb[0].mxu0
          %1630 = vmatprep.mubr.f32.mxu0 0.0
          %1631 = vmatmul.mubr.f32.gmra.mrb[0].mxu0 %v1474
          %v1632 = vpop.f32.mrb[0].mxu0
          %v1633 = vadd.f32 %v1495, %v1632
          %v1634 = vpop.f32.mrb[0].mxu0
          %1635 = vmatprep.mubr.f32.mxu0 0.0
          %1636 = vmatmul.mubr.f32.gmra.mrb[0].mxu0 %v1475
          %v1637 = vpop.f32.mrb[0].mxu0
          %v1638 = vadd.f32 %v1495, %v1637
          %v1639 = vpop.f32.mrb[0].mxu0
          %1640 = vdwg.mxu0
          %1641 = vmatprep.subr.mxu0 0.0
          %1642 = vmatpush1.msra.mxu0 %v1563
          %1643 = vmatprep.subr.mxu0 0.0
          %1644 = vmatpush1.msra.mxu0 %v1568
          %1645 = vmatprep.subr.mxu0 0.0
          %1646 = vmatpush1.msra.mxu0 %v1573
          %1647 = vmatprep.subr.mxu0 0.0
          %1648 = vmatpush1.msra.mxu0 %v1578
          %1649 = vmatprep.subr.mxu0 0.0
          %1650 = vmatpush1.msra.mxu0 %v1583
          %1651 = vmatprep.subr.mxu0 0.0
          %1652 = vmatpush1.msra.mxu0 %v1588
          %1653 = vmatprep.subr.mxu0 0.0
          %1654 = vmatpush1.msra.mxu0 %v1593
          %1655 = vmatprep.subr.mxu0 0.0
          %1656 = vmatpush1.msra.mxu0 %v1598
          %1657 = vmatprep.subr.mxu0 0.0
          %1658 = vmatpush1.msra.mxu0 %v1603
          %1659 = vmatprep.subr.mxu0 0.0
          %1660 = vmatpush1.msra.mxu0 %v1608
          %1661 = vmatprep.subr.mxu0 0.0
          %1662 = vmatpush1.msra.mxu0 %v1613
          %1663 = vmatprep.subr.mxu0 0.0
          %1664 = vmatpush1.msra.mxu0 %v1618
          %1665 = vmatprep.subr.mxu0 0.0
          %1666 = vmatpush1.msra.mxu0 %v1623
          %1667 = vmatprep.subr.mxu0 0.0
          %1668 = vmatpush1.msra.mxu0 %v1628
          %1669 = vmatprep.subr.mxu0 0.0
          %1670 = vmatpush1.msra.mxu0 %v1633
          %1671 = vmatprep.subr.mxu0 0.0
          %1672 = vmatpush1.msra.mxu0 %v1638
          %1673 = vmatprep.subr.mxu0 0.0
          %1674 = vmatpush1.msra.mxu0 0.0
          %1675 = vmatprep.subr.mxu0 0.0
          %1676 = vmatpush1.msra.mxu0 0.0
          %1677 = vmatprep.subr.mxu0 0.0
          %1678 = vmatpush1.msra.mxu0 0.0
          %1679 = vmatprep.subr.mxu0 0.0
          %1680 = vmatpush1.msra.mxu0 0.0
          %1681 = vmatprep.subr.mxu0 0.0
          %1682 = vmatpush1.msra.mxu0 0.0
          %1683 = vmatprep.subr.mxu0 0.0
          %1684 = vmatpush1.msra.mxu0 0.0
          %1685 = vmatprep.subr.mxu0 0.0
          %1686 = vmatpush1.msra.mxu0 0.0
          %1687 = vmatprep.subr.mxu0 0.0
          %1688 = vmatpush1.msra.mxu0 0.0
          %1689 = vmatprep.subr.mxu0 0.0
          %1690 = vmatpush1.msra.mxu0 0.0
          %1691 = vmatprep.subr.mxu0 0.0
          %1692 = vmatpush1.msra.mxu0 0.0
          %1693 = vmatprep.subr.mxu0 0.0
          %1694 = vmatpush1.msra.mxu0 0.0
          %1695 = vmatprep.subr.mxu0 0.0
          %1696 = vmatpush1.msra.mxu0 0.0
          %1697 = vmatprep.subr.mxu0 0.0
          %1698 = vmatpush1.msra.mxu0 0.0
          %1699 = vmatprep.subr.mxu0 0.0
          %1700 = vmatpush1.msra.mxu0 0.0
          %1701 = vmatprep.subr.mxu0 0.0
          %1702 = vmatpush1.msra.mxu0 0.0
          %1703 = vmatprep.subr.mxu0 0.0
          %1704 = vmatpush1.msra.mxu0 0.0
          %1705 = vmatprep.mubr.f32.mxu0 0.0
          %1706 = vmatmul.mubr.f32.gmra.mrb[0].mxu0 %v1395
          %v1707 = vpop.f32.mrb[0].mxu0
          %v1708 = vadd.f32 0.0, %v1707
          %v1709 = vpop.f32.mrb[0].mxu0
          %1710 = vdwg.mxu0
          %v1711 = vmul.f32 %v1708, 0.041666668
          %v1712 = vlaneseq
          %v1713 = vshrl.u32 %v1712, 7
          %v1714 = vsub.s32 0, %v1713
          %v1715 = vrot.slane %v1711, %v1714
          %v1716 = vsub.f32 %v1563, %v1715
          %v1717 = vsub.f32 %v1568, %v1715
          %v1718 = vsub.f32 %v1573, %v1715
          %v1719 = vsub.f32 %v1578, %v1715
          %v1720 = vsub.f32 %v1583, %v1715
          %v1721 = vsub.f32 %v1588, %v1715
          %v1722 = vsub.f32 %v1593, %v1715
          %v1723 = vsub.f32 %v1598, %v1715
          %v1724 = vsub.f32 %v1603, %v1715
          %v1725 = vsub.f32 %v1608, %v1715
          %v1726 = vsub.f32 %v1613, %v1715
          %v1727 = vsub.f32 %v1618, %v1715
          %v1728 = vsub.f32 %v1623, %v1715
          %v1729 = vsub.f32 %v1628, %v1715
          %v1730 = vsub.f32 %v1633, %v1715
          %v1731 = vsub.f32 %v1638, %v1715
          %v1732 = vmul.f32 %v1716, %v1716
          %v1733 = vmul.f32 %v1717, %v1717
          %v1734 = vmul.f32 %v1718, %v1718
          %v1735 = vmul.f32 %v1719, %v1719
          %v1736 = vmul.f32 %v1720, %v1720
          %v1737 = vmul.f32 %v1721, %v1721
          %v1738 = vmul.f32 %v1722, %v1722
          %v1739 = vmul.f32 %v1723, %v1723
          %v1740 = vmul.f32 %v1724, %v1724
          %v1741 = vmul.f32 %v1725, %v1725
          %v1742 = vmul.f32 %v1726, %v1726
          %v1743 = vmul.f32 %v1727, %v1727
          %v1744 = vmul.f32 %v1728, %v1728
          %v1745 = vmul.f32 %v1729, %v1729
          %v1746 = vmul.f32 %v1730, %v1730
          %v1747 = vmul.f32 %v1731, %v1731
          %1748 = vmatprep.subr.mxu0 0.0
          %1749 = vmatpush1.msra.mxu0 %v1732
          %1750 = vmatprep.subr.mxu0 0.0
          %1751 = vmatpush1.msra.mxu0 %v1733
          %1752 = vmatprep.subr.mxu0 0.0
          %1753 = vmatpush1.msra.mxu0 %v1734
          %1754 = vmatprep.subr.mxu0 0.0
          %1755 = vmatpush1.msra.mxu0 %v1735
          %1756 = vmatprep.subr.mxu0 0.0
          %1757 = vmatpush1.msra.mxu0 %v1736
          %1758 = vmatprep.subr.mxu0 0.0
          %1759 = vmatpush1.msra.mxu0 %v1737
          %1760 = vmatprep.subr.mxu0 0.0
          %1761 = vmatpush1.msra.mxu0 %v1738
          %1762 = vmatprep.subr.mxu0 0.0
          %1763 = vmatpush1.msra.mxu0 %v1739
          %1764 = vmatprep.subr.mxu0 0.0
          %1765 = vmatpush1.msra.mxu0 %v1740
          %1766 = vmatprep.subr.mxu0 0.0
          %1767 = vmatpush1.msra.mxu0 %v1741
          %1768 = vmatprep.subr.mxu0 0.0
          %1769 = vmatpush1.msra.mxu0 %v1742
          %1770 = vmatprep.subr.mxu0 0.0
          %1771 = vmatpush1.msra.mxu0 %v1743
          %1772 = vmatprep.subr.mxu0 0.0
          %1773 = vmatpush1.msra.mxu0 %v1744
          %1774 = vmatprep.subr.mxu0 0.0
          %1775 = vmatpush1.msra.mxu0 %v1745
          %1776 = vmatprep.subr.mxu0 0.0
          %1777 = vmatpush1.msra.mxu0 %v1746
          %1778 = vmatprep.subr.mxu0 0.0
          %1779 = vmatpush1.msra.mxu0 %v1747
          %1780 = vmatprep.subr.mxu0 0.0
          %1781 = vmatpush1.msra.mxu0 0.0
          %1782 = vmatprep.subr.mxu0 0.0
          %1783 = vmatpush1.msra.mxu0 0.0
          %1784 = vmatprep.subr.mxu0 0.0
          %1785 = vmatpush1.msra.mxu0 0.0
          %1786 = vmatprep.subr.mxu0 0.0
          %1787 = vmatpush1.msra.mxu0 0.0
          %1788 = vmatprep.subr.mxu0 0.0
          %1789 = vmatpush1.msra.mxu0 0.0
          %1790 = vmatprep.subr.mxu0 0.0
          %1791 = vmatpush1.msra.mxu0 0.0
          %1792 = vmatprep.subr.mxu0 0.0
          %1793 = vmatpush1.msra.mxu0 0.0
          %1794 = vmatprep.subr.mxu0 0.0
          %1795 = vmatpush1.msra.mxu0 0.0
          %1796 = vmatprep.subr.mxu0 0.0
          %1797 = vmatpush1.msra.mxu0 0.0
          %1798 = vmatprep.subr.mxu0 0.0
          %1799 = vmatpush1.msra.mxu0 0.0
          %1800 = vmatprep.subr.mxu0 0.0
          %1801 = vmatpush1.msra.mxu0 0.0
          %1802 = vmatprep.subr.mxu0 0.0
          %1803 = vmatpush1.msra.mxu0 0.0
          %1804 = vmatprep.subr.mxu0 0.0
          %1805 = vmatpush1.msra.mxu0 0.0
          %1806 = vmatprep.subr.mxu0 0.0
          %1807 = vmatpush1.msra.mxu0 0.0
          %1808 = vmatprep.subr.mxu0 0.0
          %1809 = vmatpush1.msra.mxu0 0.0
          %1810 = vmatprep.subr.mxu0 0.0
          %1811 = vmatpush1.msra.mxu0 0.0
          %1812 = vmatprep.mubr.f32.mxu0 0.0
          %1813 = vmatmul.mubr.f32.gmra.mrb[0].mxu0 %v1395
          %v1814 = vpop.f32.mrb[0].mxu0
          %v1815 = vadd.f32 0.0, %v1814
          %v1816 = vpop.f32.mrb[0].mxu0
          %1817 = vdwg.mxu0
          %v1818 = vmul.f32 %v1815, 0.041666668
          %v1819 = vadd.f32 %v1818, 1e-05
          %v1820 = vrsqrt.pop %v1819
          %v1821 = vlaneseq
          %v1822 = vshrl.u32 %v1821, 7
          %v1823 = vsub.s32 0, %v1822
          %v1824 = vrot.slane %v1820, %v1823
          %v1825 = vmul.f32 %v1716, %v1824
          %v1826 = vmul.f32 %v1717, %v1824
          %v1827 = vmul.f32 %v1718, %v1824
          %v1828 = vmul.f32 %v1719, %v1824
          %v1829 = vmul.f32 %v1720, %v1824
          %v1830 = vmul.f32 %v1721, %v1824
          %v1831 = vmul.f32 %v1722, %v1824
          %v1832 = vmul.f32 %v1723, %v1824
          %v1833 = vmul.f32 %v1724, %v1824
          %v1834 = vmul.f32 %v1725, %v1824
          %v1835 = vmul.f32 %v1726, %v1824
          %v1836 = vmul.f32 %v1727, %v1824
          %v1837 = vmul.f32 %v1728, %v1824
          %v1838 = vmul.f32 %v1729, %v1824
          %v1839 = vmul.f32 %v1730, %v1824
          %v1840 = vmul.f32 %v1731, %v1824
          %v1841 = vlaneseq
          %v1842 = vshrl.u32 %v1841, 7
          %v1843 = vsub.s32 2, %v1842
          %v1844 = vrot.slane %v803, %v1843
          %v1845 = vmul.f32 %v1825, %v1844
          %v1846 = vmul.f32 %v1826, %v1844
          %v1847 = vmul.f32 %v1827, %v1844
          %v1848 = vmul.f32 %v1828, %v1844
          %v1849 = vmul.f32 %v1829, %v1844
          %v1850 = vmul.f32 %v1830, %v1844
          %v1851 = vmul.f32 %v1831, %v1844
          %v1852 = vmul.f32 %v1832, %v1844
          %v1853 = vmul.f32 %v1833, %v1844
          %v1854 = vmul.f32 %v1834, %v1844
          %v1855 = vmul.f32 %v1835, %v1844
          %v1856 = vmul.f32 %v1836, %v1844
          %v1857 = vmul.f32 %v1837, %v1844
          %v1858 = vmul.f32 %v1838, %v1844
          %v1859 = vmul.f32 %v1839, %v1844
          %v1860 = vmul.f32 %v1840, %v1844
          %v1861 = vlaneseq
          %v1862 = vshrl.u32 %v1861, 7
          %v1863 = vsub.s32 3, %v1862
          %v1864 = vrot.slane %v803, %v1863
          %v1865 = vadd.f32 %v1845, %v1864
          %v1866 = vadd.f32 %v1846, %v1864
          %v1867 = vadd.f32 %v1847, %v1864
          %v1868 = vadd.f32 %v1848, %v1864
          %v1869 = vadd.f32 %v1849, %v1864
          %v1870 = vadd.f32 %v1850, %v1864
          %v1871 = vadd.f32 %v1851, %v1864
          %v1872 = vadd.f32 %v1852, %v1864
          %v1873 = vadd.f32 %v1853, %v1864
          %v1874 = vadd.f32 %v1854, %v1864
          %v1875 = vadd.f32 %v1855, %v1864
          %v1876 = vadd.f32 %v1856, %v1864
          %v1877 = vadd.f32 %v1857, %v1864
          %v1878 = vadd.f32 %v1858, %v1864
          %v1879 = vadd.f32 %v1859, %v1864
          %v1880 = vadd.f32 %v1860, %v1864
          %v1881 = vmax.f32 %v1865, 0.0
          %v1882 = vmax.f32 %v1866, 0.0
          %v1883 = vmax.f32 %v1867, 0.0
          %v1884 = vmax.f32 %v1868, 0.0
          %v1885 = vmax.f32 %v1869, 0.0
          %v1886 = vmax.f32 %v1870, 0.0
          %v1887 = vmax.f32 %v1871, 0.0
          %v1888 = vmax.f32 %v1872, 0.0
          %v1889 = vmax.f32 %v1873, 0.0
          %v1890 = vmax.f32 %v1874, 0.0
          %v1891 = vmax.f32 %v1875, 0.0
          %v1892 = vmax.f32 %v1876, 0.0
          %v1893 = vmax.f32 %v1877, 0.0
          %v1894 = vmax.f32 %v1878, 0.0
          %v1895 = vmax.f32 %v1879, 0.0
          %v1896 = vmax.f32 %v1880, 0.0
          %v1897 = vld [vmem:[%s634] sm:$0xff]
          %v1898 = vld [vmem:[%s634 + $0x8] sm:$0xff]
          %v1899 = vld [vmem:[%s634 + $0x10] sm:$0xff]
          %v1900 = vld [vmem:[%s634 + $0x18] sm:$0xff]
          %v1901 = vld [vmem:[%s634 + $0x20] sm:$0xff]
          %v1902 = vld [vmem:[%s634 + $0x28] sm:$0xff]
          %v1903 = vld [vmem:[%s634 + $0x30] sm:$0xff]
          %v1904 = vld [vmem:[%s634 + $0x38] sm:$0xff]
          %v1905 = vld [vmem:[%s634 + $0x40] sm:$0xff]
          %v1906 = vld [vmem:[%s634 + $0x48] sm:$0xff]
          %v1907 = vld [vmem:[%s634 + $0x50] sm:$0xff]
          %v1908 = vld [vmem:[%s634 + $0x58] sm:$0xff]
          %v1909 = vld [vmem:[%s634 + $0x60] sm:$0xff]
          %v1910 = vld [vmem:[%s634 + $0x68] sm:$0xff]
          %v1911 = vld [vmem:[%s634 + $0x70] sm:$0xff]
          %v1912 = vld [vmem:[%s634 + $0x78] sm:$0xff]
          %v1913 = vlaneseq
          %v1914 = vshrl.u32 %v1913, 7
          %v1915 = vsub.s32 4, %v1914
          %v1916 = vrot.slane %v803, %v1915
          %1917 = vmatprep.subr.mxu0 0.0
          %1918 = vmatpush1.msra.mxu0 %v1897
          %1919 = vmatprep.subr.mxu0 0.0
          %1920 = vmatpush1.msra.mxu0 %v1898
          %1921 = vmatprep.subr.mxu0 0.0
          %1922 = vmatpush1.msra.mxu0 %v1899
          %1923 = vmatprep.subr.mxu0 0.0
          %1924 = vmatpush1.msra.mxu0 %v1900
          %1925 = vmatprep.subr.mxu0 0.0
          %1926 = vmatpush1.msra.mxu0 %v1901
          %1927 = vmatprep.subr.mxu0 0.0
          %1928 = vmatpush1.msra.mxu0 %v1902
          %1929 = vmatprep.subr.mxu0 0.0
          %1930 = vmatpush1.msra.mxu0 %v1903
          %1931 = vmatprep.subr.mxu0 0.0
          %1932 = vmatpush1.msra.mxu0 %v1904
          %1933 = vmatprep.subr.mxu0 0.0
          %1934 = vmatpush1.msra.mxu0 %v1905
          %1935 = vmatprep.subr.mxu0 0.0
          %1936 = vmatpush1.msra.mxu0 %v1906
          %1937 = vmatprep.subr.mxu0 0.0
          %1938 = vmatpush1.msra.mxu0 %v1907
          %1939 = vmatprep.subr.mxu0 0.0
          %1940 = vmatpush1.msra.mxu0 %v1908
          %1941 = vmatprep.subr.mxu0 0.0
          %1942 = vmatpush1.msra.mxu0 %v1909
          %1943 = vmatprep.subr.mxu0 0.0
          %1944 = vmatpush1.msra.mxu0 %v1910
          %1945 = vmatprep.subr.mxu0 0.0
          %1946 = vmatpush1.msra.mxu0 %v1911
          %1947 = vmatprep.subr.mxu0 0.0
          %1948 = vmatpush1.msra.mxu0 %v1912
          %1949 = vmatprep.subr.mxu0 0.0
          %1950 = vmatpush1.msra.mxu0 0.0
          %1951 = vmatprep.subr.mxu0 0.0
          %1952 = vmatpush1.msra.mxu0 0.0
          %1953 = vmatprep.subr.mxu0 0.0
          %1954 = vmatpush1.msra.mxu0 0.0
          %1955 = vmatprep.subr.mxu0 0.0
          %1956 = vmatpush1.msra.mxu0 0.0
          %1957 = vmatprep.subr.mxu0 0.0
          %1958 = vmatpush1.msra.mxu0 0.0
          %1959 = vmatprep.subr.mxu0 0.0
          %1960 = vmatpush1.msra.mxu0 0.0
          %1961 = vmatprep.subr.mxu0 0.0
          %1962 = vmatpush1.msra.mxu0 0.0
          %1963 = vmatprep.subr.mxu0 0.0
          %1964 = vmatpush1.msra.mxu0 0.0
          %1965 = vmatprep.subr.mxu0 0.0
          %1966 = vmatpush1.msra.mxu0 0.0
          %1967 = vmatprep.subr.mxu0 0.0
          %1968 = vmatpush1.msra.mxu0 0.0
          %1969 = vmatprep.subr.mxu0 0.0
          %1970 = vmatpush1.msra.mxu0 0.0
          %1971 = vmatprep.subr.mxu0 0.0
          %1972 = vmatpush1.msra.mxu0 0.0
          %1973 = vmatprep.subr.mxu0 0.0
          %1974 = vmatpush1.msra.mxu0 0.0
          %1975 = vmatprep.subr.mxu0 0.0
          %1976 = vmatpush1.msra.mxu0 0.0
          %1977 = vmatprep.subr.mxu0 0.0
          %1978 = vmatpush1.msra.mxu0 0.0
          %1979 = vmatprep.subr.mxu0 0.0
          %1980 = vmatpush1.msra.mxu0 0.0
          %1981 = vmatprep.mubr.f32.mxu0 0.0
          %1982 = vmatmul.mubr.f32.gmra.mrb[0].mxu0 %v1881
          %v1983 = vpop.f32.mrb[0].mxu0
          %v1984 = vadd.f32 %v1916, %v1983
          %v1985 = vpop.f32.mrb[0].mxu0
          %1986 = vmatprep.mubr.f32.mxu0 0.0
          %1987 = vmatmul.mubr.f32.gmra.mrb[0].mxu0 %v1882
          %v1988 = vpop.f32.mrb[0].mxu0
          %v1989 = vadd.f32 %v1916, %v1988
          %v1990 = vpop.f32.mrb[0].mxu0
          %1991 = vmatprep.mubr.f32.mxu0 0.0
          %1992 = vmatmul.mubr.f32.gmra.mrb[0].mxu0 %v1883
          %v1993 = vpop.f32.mrb[0].mxu0
          %v1994 = vadd.f32 %v1916, %v1993
          %v1995 = vpop.f32.mrb[0].mxu0
          %1996 = vmatprep.mubr.f32.mxu0 0.0
          %1997 = vmatmul.mubr.f32.gmra.mrb[0].mxu0 %v1884
          %v1998 = vpop.f32.mrb[0].mxu0
          %v1999 = vadd.f32 %v1916, %v1998
          %v2000 = vpop.f32.mrb[0].mxu0
          %2001 = vmatprep.mubr.f32.mxu0 0.0
          %2002 = vmatmul.mubr.f32.gmra.mrb[0].mxu0 %v1885
          %v2003 = vpop.f32.mrb[0].mxu0
          %v2004 = vadd.f32 %v1916, %v2003
          %v2005 = vpop.f32.mrb[0].mxu0
          %2006 = vmatprep.mubr.f32.mxu0 0.0
          %2007 = vmatmul.mubr.f32.gmra.mrb[0].mxu0 %v1886
          %v2008 = vpop.f32.mrb[0].mxu0
          %v2009 = vadd.f32 %v1916, %v2008
          %v2010 = vpop.f32.mrb[0].mxu0
          %2011 = vmatprep.mubr.f32.mxu0 0.0
          %2012 = vmatmul.mubr.f32.gmra.mrb[0].mxu0 %v1887
          %v2013 = vpop.f32.mrb[0].mxu0
          %v2014 = vadd.f32 %v1916, %v2013
          %v2015 = vpop.f32.mrb[0].mxu0
          %2016 = vmatprep.mubr.f32.mxu0 0.0
          %2017 = vmatmul.mubr.f32.gmra.mrb[0].mxu0 %v1888
          %v2018 = vpop.f32.mrb[0].mxu0
          %v2019 = vadd.f32 %v1916, %v2018
          %v2020 = vpop.f32.mrb[0].mxu0
          %2021 = vmatprep.mubr.f32.mxu0 0.0
          %2022 = vmatmul.mubr.f32.gmra.mrb[0].mxu0 %v1889
          %v2023 = vpop.f32.mrb[0].mxu0
          %v2024 = vadd.f32 %v1916, %v2023
          %v2025 = vpop.f32.mrb[0].mxu0
          %2026 = vmatprep.mubr.f32.mxu0 0.0
          %2027 = vmatmul.mubr.f32.gmra.mrb[0].mxu0 %v1890
          %v2028 = vpop.f32.mrb[0].mxu0
          %v2029 = vadd.f32 %v1916, %v2028
          %v2030 = vpop.f32.mrb[0].mxu0
          %2031 = vmatprep.mubr.f32.mxu0 0.0
          %2032 = vmatmul.mubr.f32.gmra.mrb[0].mxu0 %v1891
          %v2033 = vpop.f32.mrb[0].mxu0
          %v2034 = vadd.f32 %v1916, %v2033
          %v2035 = vpop.f32.mrb[0].mxu0
          %2036 = vmatprep.mubr.f32.mxu0 0.0
          %2037 = vmatmul.mubr.f32.gmra.mrb[0].mxu0 %v1892
          %v2038 = vpop.f32.mrb[0].mxu0
          %v2039 = vadd.f32 %v1916, %v2038
          %v2040 = vpop.f32.mrb[0].mxu0
          %2041 = vmatprep.mubr.f32.mxu0 0.0
          %2042 = vmatmul.mubr.f32.gmra.mrb[0].mxu0 %v1893
          %v2043 = vpop.f32.mrb[0].mxu0
          %v2044 = vadd.f32 %v1916, %v2043
          %v2045 = vpop.f32.mrb[0].mxu0
          %2046 = vmatprep.mubr.f32.mxu0 0.0
          %2047 = vmatmul.mubr.f32.gmra.mrb[0].mxu0 %v1894
          %v2048 = vpop.f32.mrb[0].mxu0
          %v2049 = vadd.f32 %v1916, %v2048
          %v2050 = vpop.f32.mrb[0].mxu0
          %2051 = vmatprep.mubr.f32.mxu0 0.0
          %2052 = vmatmul.mubr.f32.gmra.mrb[0].mxu0 %v1895
          %v2053 = vpop.f32.mrb[0].mxu0
          %v2054 = vadd.f32 %v1916, %v2053
          %v2055 = vpop.f32.mrb[0].mxu0
          %2056 = vmatprep.mubr.f32.mxu0 0.0
          %2057 = vmatmul.mubr.f32.gmra.mrb[0].mxu0 %v1896
          %v2058 = vpop.f32.mrb[0].mxu0
          %v2059 = vadd.f32 %v1916, %v2058
          %v2060 = vpop.f32.mrb[0].mxu0
          %2061 = vdwg.mxu0
          %v2062 = vmax.f32 %v1984, 0.0
          %v2063 = vmax.f32 %v1989, 0.0
          %v2064 = vmax.f32 %v1994, 0.0
          %v2065 = vmax.f32 %v1999, 0.0
          %v2066 = vmax.f32 %v2004, 0.0
          %v2067 = vmax.f32 %v2009, 0.0
          %v2068 = vmax.f32 %v2014, 0.0
          %v2069 = vmax.f32 %v2019, 0.0
          %v2070 = vmax.f32 %v2024, 0.0
          %v2071 = vmax.f32 %v2029, 0.0
          %v2072 = vmax.f32 %v2034, 0.0
          %v2073 = vmax.f32 %v2039, 0.0
          %v2074 = vmax.f32 %v2044, 0.0
          %v2075 = vmax.f32 %v2049, 0.0
          %v2076 = vmax.f32 %v2054, 0.0
          %v2077 = vmax.f32 %v2059, 0.0
          %2078 = vst [vmem:[#allocation2] sm:$0xff] %v2062
          %2079 = vst [vmem:[#allocation2 + $0x8] sm:$0xff] %v2063
          %2080 = vst [vmem:[#allocation2 + $0x10] sm:$0xff] %v2064
          %2081 = vst [vmem:[#allocation2 + $0x18] sm:$0xff] %v2065
          %2082 = vst [vmem:[#allocation2 + $0x20] sm:$0xff] %v2066
          %2083 = vst [vmem:[#allocation2 + $0x28] sm:$0xff] %v2067
          %2084 = vst [vmem:[#allocation2 + $0x30] sm:$0xff] %v2068
          %2085 = vst [vmem:[#allocation2 + $0x38] sm:$0xff] %v2069
          %2086 = vst [vmem:[#allocation2 + $0x40] sm:$0xff] %v2070
          %2087 = vst [vmem:[#allocation2 + $0x48] sm:$0xff] %v2071
          %2088 = vst [vmem:[#allocation2 + $0x50] sm:$0xff] %v2072
          %2089 = vst [vmem:[#allocation2 + $0x58] sm:$0xff] %v2073
          %2090 = vst [vmem:[#allocation2 + $0x60] sm:$0xff] %v2074
          %2091 = vst [vmem:[#allocation2 + $0x68] sm:$0xff] %v2075
          %2092 = vst [vmem:[#allocation2 + $0x70] sm:$0xff] %v2076
          %2093 = vst [vmem:[#allocation2 + $0x78] sm:$0xff] %v2077
          %v2094 = vpack.c.bf16 %v2063, %v2062
          %v2095 = vpack.c.bf16 %v2065, %v2064
          %v2096 = vpack.c.bf16 %v2067, %v2066
          %v2097 = vpack.c.bf16 %v2069, %v2068
          %v2098 = vpack.c.bf16 %v2071, %v2070
          %v2099 = vpack.c.bf16 %v2073, %v2072
          %v2100 = vpack.c.bf16 %v2075, %v2074
          %v2101 = vpack.c.bf16 %v2077, %v2076
          %2102 = vst [vmem:[#allocation3] sm:$0xff] %v2094
          %2103 = vst [vmem:[#allocation3 + $0x8] sm:$0xff] %v2095
          %2104 = vst [vmem:[#allocation3 + $0x10] sm:$0xff] %v2096
          %2105 = vst [vmem:[#allocation3 + $0x18] sm:$0xff] %v2097
          %2106 = vst [vmem:[#allocation3 + $0x20] sm:$0xff] %v2098
          %2107 = vst [vmem:[#allocation3 + $0x28] sm:$0xff] %v2099
          %2108 = vst [vmem:[#allocation3 + $0x30] sm:$0xff] %v2100
          %2109 = vst [vmem:[#allocation3 + $0x38] sm:$0xff] %v2101
          %p2110 = scmp.eq.s32.totalorder %s44, 1
          // Predicated region
          $region133: #{tpu_custom_call.1} parent=131 // pred_check
            %p2111 = pneg %p2110
          $region134: #{tpu_custom_call.1} parent=131 // pred_check_branch
            %2113 = sbr.rel (%p2111) target = $region136
          $region135: #{tpu_custom_call.1} parent=131 // pred_region
            %v2114 = vld [vmem:[#allocation18] sm:$0xf]
            %v2115 = vld [vmem:[#allocation18 + $0x4] sm:$0xf]
            %v2118 = vunpack.c.l.b16 %v2114
            %v2119 = vunpack.c.l.b16 %v2115
            %v2120 = vpack.c.b16 %v2119, %v2118
            %2122 = vmatprep.subr.bf16.mxu0 0
            %2123 = vmatpush1.bf16.msra.mxu0 %v2094
            %2124 = vmatprep.subr.bf16.mxu0 0
            %2125 = vmatpush1.bf16.msra.mxu0 %v2095
            %2126 = vmatprep.subr.bf16.mxu0 0
            %2127 = vmatpush1.bf16.msra.mxu0 %v2096
            %2128 = vmatprep.subr.bf16.mxu0 0
            %2129 = vmatpush1.bf16.msra.mxu0 %v2097
            %2130 = vmatprep.subr.bf16.mxu0 0
            %2131 = vmatpush1.bf16.msra.mxu0 %v2098
            %2132 = vmatprep.subr.bf16.mxu0 0
            %2133 = vmatpush1.bf16.msra.mxu0 %v2099
            %2134 = vmatprep.subr.bf16.mxu0 0
            %2135 = vmatpush1.bf16.msra.mxu0 %v2100
            %2136 = vmatprep.subr.bf16.mxu0 0
            %2137 = vmatpush1.bf16.msra.mxu0 %v2101
            %2138 = vmatprep.subr.bf16.mxu0 0
            %2139 = vmatpush1.bf16.msra.mxu0 0
            %2140 = vmatprep.subr.bf16.mxu0 0
            %2141 = vmatpush1.bf16.msra.mxu0 0
            %2142 = vmatprep.subr.bf16.mxu0 0
            %2143 = vmatpush1.bf16.msra.mxu0 0
            %2144 = vmatprep.subr.bf16.mxu0 0
            %2145 = vmatpush1.bf16.msra.mxu0 0
            %2146 = vmatprep.subr.bf16.mxu0 0
            %2147 = vmatpush1.bf16.msra.mxu0 0
            %2148 = vmatprep.subr.bf16.mxu0 0
            %2149 = vmatpush1.bf16.msra.mxu0 0
            %2150 = vmatprep.subr.bf16.mxu0 0
            %2151 = vmatpush1.bf16.msra.mxu0 0
            %2152 = vmatprep.subr.bf16.mxu0 0
            %2153 = vmatpush1.bf16.msra.mxu0 0
            %2154 = vmatprep.mubr.bf16.mxu0 0
            %2155 = vmatmul.mubr.bf16.gmra.mrb[0].mxu0 %v2120
            %v2156 = vpop.f32.mrb[0].mxu0
            %v2157 = vadd.f32 0.0, %v2156
            %v2158 = vpop.f32.mrb[0].mxu0
            %v2159 = vpop.f32.mrb[0].mxu0
            %v2160 = vadd.f32 0.0, %v2159
            %v2161 = vpop.f32.mrb[0].mxu0
            %2162 = vdwg.mxu0
            %v2163 = vld [vmem:[#allocation20] sm:$0xff]
            %v2164 = vld [vmem:[#allocation20 + $0x8] sm:$0xff]
            %v2165 = vld [vmem:[#allocation20 + $0x10] sm:$0xff]
            %v2166 = vld [vmem:[#allocation20 + $0x18] sm:$0xff]
            %v2167 = vld [vmem:[#allocation20 + $0x20] sm:$0xff]
            %v2168 = vld [vmem:[#allocation20 + $0x28] sm:$0xff]
            %v2169 = vld [vmem:[#allocation20 + $0x30] sm:$0xff]
            %v2170 = vld [vmem:[#allocation20 + $0x38] sm:$0xff]
            %v2171 = vld [vmem:[#allocation20 + $0x40] sm:$0xff]
            %v2172 = vld [vmem:[#allocation20 + $0x48] sm:$0xff]
            %v2173 = vld [vmem:[#allocation20 + $0x50] sm:$0xff]
            %v2174 = vld [vmem:[#allocation20 + $0x58] sm:$0xff]
            %v2175 = vld [vmem:[#allocation20 + $0x60] sm:$0xff]
            %v2176 = vld [vmem:[#allocation20 + $0x68] sm:$0xff]
            %v2177 = vld [vmem:[#allocation20 + $0x70] sm:$0xff]
            %v2178 = vld [vmem:[#allocation20 + $0x78] sm:$0xff]
            %v2179 = vld [vmem:[#allocation21] sm:$0x1]
            %v2181 = vlaneseq
            %v2182 = vshrl.u32 %v2181, 7
            %v2183 = vsub.s32 0, %v2182
            %v2184 = vrot.slane %v2179, %v2183
            %2186 = vmatprep.subr.mxu0 0.0
            %2187 = vmatpush1.msra.mxu0 %v2163
            %2188 = vmatprep.subr.mxu0 0.0
            %2189 = vmatpush1.msra.mxu0 %v2164
            %2190 = vmatprep.subr.mxu0 0.0
            %2191 = vmatpush1.msra.mxu0 %v2165
            %2192 = vmatprep.subr.mxu0 0.0
            %2193 = vmatpush1.msra.mxu0 %v2166
            %2194 = vmatprep.subr.mxu0 0.0
            %2195 = vmatpush1.msra.mxu0 %v2167
            %2196 = vmatprep.subr.mxu0 0.0
            %2197 = vmatpush1.msra.mxu0 %v2168
            %2198 = vmatprep.subr.mxu0 0.0
            %2199 = vmatpush1.msra.mxu0 %v2169
            %2200 = vmatprep.subr.mxu0 0.0
            %2201 = vmatpush1.msra.mxu0 %v2170
            %2202 = vmatprep.subr.mxu0 0.0
            %2203 = vmatpush1.msra.mxu0 %v2171
            %2204 = vmatprep.subr.mxu0 0.0
            %2205 = vmatpush1.msra.mxu0 %v2172
            %2206 = vmatprep.subr.mxu0 0.0
            %2207 = vmatpush1.msra.mxu0 %v2173
            %2208 = vmatprep.subr.mxu0 0.0
            %2209 = vmatpush1.msra.mxu0 %v2174
            %2210 = vmatprep.subr.mxu0 0.0
            %2211 = vmatpush1.msra.mxu0 %v2175
            %2212 = vmatprep.subr.mxu0 0.0
            %2213 = vmatpush1.msra.mxu0 %v2176
            %2214 = vmatprep.subr.mxu0 0.0
            %2215 = vmatpush1.msra.mxu0 %v2177
            %2216 = vmatprep.subr.mxu0 0.0
            %2217 = vmatpush1.msra.mxu0 %v2178
            %2218 = vmatprep.subr.mxu0 0.0
            %2219 = vmatpush1.msra.mxu0 0.0
            %2220 = vmatprep.subr.mxu0 0.0
            %2221 = vmatpush1.msra.mxu0 0.0
            %2222 = vmatprep.subr.mxu0 0.0
            %2223 = vmatpush1.msra.mxu0 0.0
            %2224 = vmatprep.subr.mxu0 0.0
            %2225 = vmatpush1.msra.mxu0 0.0
            %2226 = vmatprep.subr.mxu0 0.0
            %2227 = vmatpush1.msra.mxu0 0.0
            %2228 = vmatprep.subr.mxu0 0.0
            %2229 = vmatpush1.msra.mxu0 0.0
            %2230 = vmatprep.subr.mxu0 0.0
            %2231 = vmatpush1.msra.mxu0 0.0
            %2232 = vmatprep.subr.mxu0 0.0
            %2233 = vmatpush1.msra.mxu0 0.0
            %2234 = vmatprep.subr.mxu0 0.0
            %2235 = vmatpush1.msra.mxu0 0.0
            %2236 = vmatprep.subr.mxu0 0.0
            %2237 = vmatpush1.msra.mxu0 0.0
            %2238 = vmatprep.subr.mxu0 0.0
            %2239 = vmatpush1.msra.mxu0 0.0
            %2240 = vmatprep.subr.mxu0 0.0
            %2241 = vmatpush1.msra.mxu0 0.0
            %2242 = vmatprep.subr.mxu0 0.0
            %2243 = vmatpush1.msra.mxu0 0.0
            %2244 = vmatprep.subr.mxu0 0.0
            %2245 = vmatpush1.msra.mxu0 0.0
            %2246 = vmatprep.subr.mxu0 0.0
            %2247 = vmatpush1.msra.mxu0 0.0
            %2248 = vmatprep.subr.mxu0 0.0
            %2249 = vmatpush1.msra.mxu0 0.0
            %2250 = vmatprep.mubr.f32.mxu0 0.0
            %2251 = vmatmul.mubr.f32.gmra.mrb[0].mxu0 %v2157
            %v2252 = vpop.f32.mrb[0].mxu0
            %v2253 = vadd.f32 %v2184, %v2252
            %v2254 = vpop.f32.mrb[0].mxu0
            %2255 = vmatprep.mubr.f32.mxu0 0.0
            %2256 = vmatmul.mubr.f32.gmra.mrb[0].mxu0 %v2160
            %v2257 = vpop.f32.mrb[0].mxu0
            %v2258 = vadd.f32 %v2184, %v2257
            %v2259 = vpop.f32.mrb[0].mxu0
            %2260 = vdwg.mxu0
            %v2261 = vmax.f32 %v2253, 0.0
            %v2262 = vmax.f32 %v2258, 0.0
            %v2263 = vld [vmem:[#allocation23] sm:$0xff]
            %v2264 = vld [vmem:[#allocation23 + $0x8] sm:$0xff]
            %v2265 = vld [vmem:[#allocation23 + $0x10] sm:$0xff]
            %v2266 = vld [vmem:[#allocation23 + $0x18] sm:$0xff]
            %v2267 = vld [vmem:[#allocation23 + $0x20] sm:$0xff]
            %v2268 = vld [vmem:[#allocation23 + $0x28] sm:$0xff]
            %v2269 = vld [vmem:[#allocation23 + $0x30] sm:$0xff]
            %v2270 = vld [vmem:[#allocation23 + $0x38] sm:$0xff]
            %v2271 = vld [vmem:[#allocation23 + $0x40] sm:$0xff]
            %v2272 = vld [vmem:[#allocation23 + $0x48] sm:$0xff]
            %v2273 = vld [vmem:[#allocation23 + $0x50] sm:$0xff]
            %v2274 = vld [vmem:[#allocation23 + $0x58] sm:$0xff]
            %v2275 = vld [vmem:[#allocation23 + $0x60] sm:$0xff]
            %v2276 = vld [vmem:[#allocation23 + $0x68] sm:$0xff]
            %v2277 = vld [vmem:[#allocation23 + $0x70] sm:$0xff]
            %v2278 = vld [vmem:[#allocation23 + $0x78] sm:$0xff]
            %v2279 = vld [vmem:[#allocation24] sm:$0x1]
            %v2281 = vlaneseq
            %v2282 = vshrl.u32 %v2281, 7
            %v2283 = vsub.s32 0, %v2282
            %v2284 = vrot.slane %v2279, %v2283
            %2286 = vmatprep.subr.mxu0 0.0
            %2287 = vmatpush1.msra.mxu0 %v2263
            %2288 = vmatprep.subr.mxu0 0.0
            %2289 = vmatpush1.msra.mxu0 %v2264
            %2290 = vmatprep.subr.mxu0 0.0
            %2291 = vmatpush1.msra.mxu0 %v2265
            %2292 = vmatprep.subr.mxu0 0.0
            %2293 = vmatpush1.msra.mxu0 %v2266
            %2294 = vmatprep.subr.mxu0 0.0
            %2295 = vmatpush1.msra.mxu0 %v2267
            %2296 = vmatprep.subr.mxu0 0.0
            %2297 = vmatpush1.msra.mxu0 %v2268
            %2298 = vmatprep.subr.mxu0 0.0
            %2299 = vmatpush1.msra.mxu0 %v2269
            %2300 = vmatprep.subr.mxu0 0.0
            %2301 = vmatpush1.msra.mxu0 %v2270
            %2302 = vmatprep.subr.mxu0 0.0
            %2303 = vmatpush1.msra.mxu0 %v2271
            %2304 = vmatprep.subr.mxu0 0.0
            %2305 = vmatpush1.msra.mxu0 %v2272
            %2306 = vmatprep.subr.mxu0 0.0
            %2307 = vmatpush1.msra.mxu0 %v2273
            %2308 = vmatprep.subr.mxu0 0.0
            %2309 = vmatpush1.msra.mxu0 %v2274
            %2310 = vmatprep.subr.mxu0 0.0
            %2311 = vmatpush1.msra.mxu0 %v2275
            %2312 = vmatprep.subr.mxu0 0.0
            %2313 = vmatpush1.msra.mxu0 %v2276
            %2314 = vmatprep.subr.mxu0 0.0
            %2315 = vmatpush1.msra.mxu0 %v2277
            %2316 = vmatprep.subr.mxu0 0.0
            %2317 = vmatpush1.msra.mxu0 %v2278
            %2318 = vmatprep.subr.mxu0 0.0
            %2319 = vmatpush1.msra.mxu0 0.0
            %2320 = vmatprep.subr.mxu0 0.0
            %2321 = vmatpush1.msra.mxu0 0.0
            %2322 = vmatprep.subr.mxu0 0.0
            %2323 = vmatpush1.msra.mxu0 0.0
            %2324 = vmatprep.subr.mxu0 0.0
            %2325 = vmatpush1.msra.mxu0 0.0
            %2326 = vmatprep.subr.mxu0 0.0
            %2327 = vmatpush1.msra.mxu0 0.0
            %2328 = vmatprep.subr.mxu0 0.0
            %2329 = vmatpush1.msra.mxu0 0.0
            %2330 = vmatprep.subr.mxu0 0.0
            %2331 = vmatpush1.msra.mxu0 0.0
            %2332 = vmatprep.subr.mxu0 0.0
            %2333 = vmatpush1.msra.mxu0 0.0
            %2334 = vmatprep.subr.mxu0 0.0
            %2335 = vmatpush1.msra.mxu0 0.0
            %2336 = vmatprep.subr.mxu0 0.0
            %2337 = vmatpush1.msra.mxu0 0.0
            %2338 = vmatprep.subr.mxu0 0.0
            %2339 = vmatpush1.msra.mxu0 0.0
            %2340 = vmatprep.subr.mxu0 0.0
            %2341 = vmatpush1.msra.mxu0 0.0
            %2342 = vmatprep.subr.mxu0 0.0
            %2343 = vmatpush1.msra.mxu0 0.0
            %2344 = vmatprep.subr.mxu0 0.0
            %2345 = vmatpush1.msra.mxu0 0.0
            %2346 = vmatprep.subr.mxu0 0.0
            %2347 = vmatpush1.msra.mxu0 0.0
            %2348 = vmatprep.subr.mxu0 0.0
            %2349 = vmatpush1.msra.mxu0 0.0
            %2350 = vmatprep.mubr.f32.mxu0 0.0
            %2351 = vmatmul.mubr.f32.gmra.mrb[0].mxu0 %v2261
            %v2352 = vpop.f32.mrb[0].mxu0
            %v2353 = vadd.f32 %v2284, %v2352
            %v2354 = vpop.f32.mrb[0].mxu0
            %2355 = vmatprep.mubr.f32.mxu0 0.0
            %2356 = vmatmul.mubr.f32.gmra.mrb[0].mxu0 %v2262
            %v2357 = vpop.f32.mrb[0].mxu0
            %v2358 = vadd.f32 %v2284, %v2357
            %v2359 = vpop.f32.mrb[0].mxu0
            %2360 = vdwg.mxu0
            %2361 = vst [vmem:[#allocation26] sm:$0xff] %v2353
            %2362 = vst [vmem:[#allocation26 + $0x8] sm:$0xff] %v2358
          $region136: #{tpu_custom_call.1} parent=131 // pred_fallthru
            _
        $region132: #{tpu_custom_call.1} parent=67 // pred_fallthru
          _
        // Predicated region
        $region137: #{tpu_custom_call.1} parent=67 // pred_check
          %p2363 = pneg %p352
        $region138: #{tpu_custom_call.1} parent=67 // pred_check_branch
          %2365 = sbr.rel (%p2363) target = $region140
        $region139: #{tpu_custom_call.1} parent=67 // pred_region
          %s2367 = ssub.s32 256, 256
          %2368 = vsyncadd [#allocation8], %s2367
          %s2369 = sshll.u32 [#allocation26], 4
          %s2370 = int_to_ptr.vmem [resolvable:$true] %s2369
          %2375 = dma.vmem_to_hbm [thread:$0]  %s2370, 256, %s13, [#allocation8], 128, 128, 8
        $region140: #{tpu_custom_call.1} parent=67 // pred_fallthru
          _
        // Predicated region
        $region141: #{tpu_custom_call.1} parent=67 // pred_check
          %p2376 = pneg %p352
        $region142: #{tpu_custom_call.1} parent=67 // pred_check_branch
          %2378 = sbr.rel (%p2376) target = $region144
        $region143: #{tpu_custom_call.1} parent=67 // pred_region
          %2379 = dma.done [#allocation8], 256
        $region144: #{tpu_custom_call.1} parent=67 // pred_fallthru
          _
      $region68: #{tpu_custom_call.1} parent=5 // pred_fallthru
        _
      %p2380 = scmp.le.s32.totalorder 2, %s35
      // Predicated region
      $region145: #{tpu_custom_call.1} parent=5 // pred_check
        %p2381 = pneg %p2380
      $region146: #{tpu_custom_call.1} parent=5 // pred_check_branch
        %2383 = sbr.rel (%p2381) target = $region148
      $region147: #{tpu_custom_call.1} parent=5 // pred_region
        %s2384 = ssub.s32 %s35, 2
      $region148: #{tpu_custom_call.1} parent=5 // pred_fallthru
        _
    $region6: #{tpu_custom_call.1} parent=1 // loop_footer
      %s39 = sadd.s32 1, %s35
    $region7: #{tpu_custom_call.1} parent=1 // loop_footer_branch
      %34 = sbr.rel target = $region3
    $region8: #{tpu_custom_call.1} parent=1 // loop_exit
      _
    %2385 = vsyncpa [#allocation7], 1
    %s2386 = scalar_lea.sflag [#allocation7], 1
    %2387 = vsyncpa %s2386, 1
    %2388 = vsyncpa [#allocation10], 1
    %s2389 = scalar_lea.sflag [#allocation10], 1
    %2390 = vsyncpa %s2389, 1
    %2391 = vsyncpa [#allocation13], 1
    %s2392 = scalar_lea.sflag [#allocation13], 1
    %2393 = vsyncpa %s2392, 1
    %2394 = vsyncpa [#allocation16], 1
    %s2395 = scalar_lea.sflag [#allocation16], 1
    %2396 = vsyncpa %s2395, 1
    %2397 = vsyncpa [#allocation19], 1
    %2398 = vsyncpa [#allocation22], 1
    %2399 = vsyncpa [#allocation25], 1
    %2400 = vsyncpa [#allocation8], 1
    %s2401 = scalar_lea.sflag [#allocation8], 1
    %2402 = vsyncpa %s2401, 1
  %2403 = vsyncmov [#allocation5]
  %s2404 = vpop.sfrf %2403
  %p2405 = scmp.eq.s32.totalorder %s2404, 0
  %p2406 = pneg %p2405
  %2408 = shalt.err (%p2406)

</llo_original>
